<compile_context>
chip_gen: v5e
topology: v5e:2x2
jax: 0.10.0
libtpu: 0.0.40
codegen_flags: <defaults>
</compile_context>

<pallas_src>
import math
import jax
import jax.numpy as jnp
from jax.experimental import pallas as pl
from jax.experimental.pallas import tpu as pltpu

# ----------------------------------------------------------------------------
# Tiling policy (shared between parameter packing and the runtime matmul)
# ----------------------------------------------------------------------------
def _rup(v, m):
    return ((v + m - 1) // m) * m


def _tile_k(k):
    return 256 if k > 128 else 128


def _tile_n(n):
    return 256 if n > 128 else 128


def _tile_m(m):
    if m >= 512:
        return 512
    return max(8, _rup(m, 8))


# ----------------------------------------------------------------------------
# Pallas matmul kernel: bf16 operands, f32 accumulator, fused bias + PReLU
# ----------------------------------------------------------------------------
def _mm_bias_act_kernel(a_ref, b_ref, bias_ref, slope_ref, o_ref, acc_ref):
    @pl.when(pl.program_id(2) == 0)
    def _():
        acc_ref[...] = jnp.zeros_like(acc_ref)

    acc_ref[...] += jnp.dot(a_ref[...], b_ref[...],
                            preferred_element_type=jnp.float32)

    @pl.when(pl.program_id(2) == pl.num_programs(2) - 1)
    def _():
        z = acc_ref[...] + bias_ref[...]
        s = slope_ref[...]
        o_ref[...] = jnp.where(z >= 0.0, z, s * z).astype(o_ref.dtype)


def _matmul(a, b_p, bias_p, slope_p, N_out):
    """a:(M,K) any float; b_p:(Kp,Np) bf16 pre-padded; bias/slope:(1,Np) f32."""
    M, K = a.shape
    Kp, Np = b_p.shape
    TK = 256 if Kp % 256 == 0 else 128
    TN = 256 if Np % 256 == 0 else 128
    TM = _tile_m(M)
    Mp = _rup(M, TM)
    a_p = a.astype(jnp.bfloat16)
    if (Mp - M) or (Kp - K):
        a_p = jnp.pad(a_p, ((0, Mp - M), (0, Kp - K)))
    out = pl.pallas_call(
        _mm_bias_act_kernel,
        out_shape=jax.ShapeDtypeStruct((Mp, Np), jnp.float32),
        grid=(Mp // TM, Np // TN, Kp // TK),
        in_specs=[
            pl.BlockSpec((TM, TK), lambda i, j, k: (i, k)),
            pl.BlockSpec((TK, TN), lambda i, j, k: (k, j)),
            pl.BlockSpec((1, TN), lambda i, j, k: (0, j)),
            pl.BlockSpec((1, TN), lambda i, j, k: (0, j)),
        ],
        out_specs=pl.BlockSpec((TM, TN), lambda i, j, k: (i, j)),
        scratch_shapes=[pltpu.VMEM((TM, TN), jnp.float32)],
        compiler_params=pltpu.CompilerParams(
            dimension_semantics=("parallel", "parallel", "arbitrary"),
            vmem_limit_bytes=32 * 1024 * 1024),
    )(a_p, b_p, bias_p, slope_p)
    return out[:M, :N_out]


def matmul_packed(a, pack):
    return _matmul(a, pack['wm'], pack['bias'], pack['slope'], pack['O'])


def matmul_plain(a, b):
    """Generic (M,K)@(K,N) in bf16 with f32 accumulation (used for correlation)."""
    M, K = a.shape
    K2, N = b.shape
    assert K == K2
    Kp, Np = _rup(K, _tile_k(K)), _rup(N, _tile_n(N))
    b_p = jnp.pad(b.astype(jnp.bfloat16), ((0, Kp - K), (0, Np - N)))
    bias = jnp.zeros((1, Np), jnp.float32)
    slope = jnp.ones((1, Np), jnp.float32)
    return _matmul(a, b_p, bias, slope, N)


# ----------------------------------------------------------------------------
# Weight packing (done once at parameter construction time)
# ----------------------------------------------------------------------------
def make_conv_pack(w, b, slope=None):
    """w:(O,C,kh,kw) f32 -> pre-transposed, pre-padded bf16 (Kp,Np) matrix."""
    O, C, kh, kw = w.shape
    K = kh * kw * C
    Kp, Np = _rup(K, _tile_k(K)), _rup(O, _tile_n(O))
    wm = jnp.transpose(w, (2, 3, 1, 0)).reshape(K, O)
    wm = jnp.pad(wm, ((0, Kp - K), (0, Np - O))).astype(jnp.bfloat16)
    bias = jnp.pad(b.astype(jnp.float32).reshape(1, O), ((0, 0), (0, Np - O)))
    if slope is None:
        slope = jnp.ones((O,), jnp.float32)
    sl = jnp.pad(slope.astype(jnp.float32).reshape(1, O), ((0, 0), (0, Np - O)),
                 constant_values=1.0)
    return {'wm': wm, 'bias': bias, 'slope': sl,
            'O': O, 'C': C, 'kh': kh, 'kw': kw}


# ----------------------------------------------------------------------------
# Conv / sub-pixel deconv built on the Pallas matmul
# ----------------------------------------------------------------------------
def conv2d(x, pack, stride=1, padding=0):
    """PyTorch-semantics NCHW conv; hot path = Pallas matmul (fused bias/act)."""
    N, C, H, W = x.shape
    assert C == pack['C']
    kh, kw, O = pack['kh'], pack['kw'], pack['O']
    if isinstance(padding, int):
        pad_t = pad_b = pad_l = pad_r = padding
    else:
        (pad_t, pad_b), (pad_l, pad_r) = padding
    x_nhwc = jnp.transpose(x, (0, 2, 3, 1)).astype(jnp.bfloat16)
    xp = jnp.pad(x_nhwc, ((0, 0), (pad_t, pad_b), (pad_l, pad_r), (0, 0)))
    Hp, Wp = H + pad_t + pad_b, W + pad_l + pad_r
    out_h = (Hp - kh) // stride + 1
    out_w = (Wp - kw) // stride + 1
    cols = []
    for i in range(kh):
        for j in range(kw):
            cols.append(xp[:, i:i + (out_h - 1) * stride + 1:stride,
                              j:j + (out_w - 1) * stride + 1:stride, :])
    patches = jnp.concatenate(cols, axis=-1).reshape(N * out_h * out_w,
                                                     kh * kw * C)
    y = matmul_packed(patches, pack)                      # (M, O) f32
    return jnp.transpose(y.reshape(N, out_h, out_w, O), (0, 3, 1, 2))


def deconv4x4_s2(x, parity_packs):
    """ConvTranspose2d(k=4,s=2,p=1) via sub-pixel decomposition (4x less work)."""
    N, C, H, W = x.shape
    pads = {'e': (1, 0), 'o': (0, 1)}
    ys = {}
    for rp in ('e', 'o'):
        for cp in ('e', 'o'):
            ys[rp + cp] = conv2d(x, parity_packs[rp + cp], stride=1,
                                 padding=(pads[rp], pads[cp]))
    O = ys['ee'].shape[1]
    t = jnp.stack([jnp.stack([ys['ee'], ys['eo']], 0),
                   jnp.stack([ys['oe'], ys['oo']], 0)], 0)   # (2,2,N,O,H,W)
    # out[n,o,2m+r,2k+c] = t[r,c,n,o,m,k]
    return jnp.transpose(t, (2, 3, 4, 0, 5, 1)).reshape(N, O, 2 * H, 2 * W)


# ----------------------------------------------------------------------------
# Plain-JAX glue ops (gather / reduction based)
# ----------------------------------------------------------------------------
def relu(x):
    return jnp.maximum(x, 0.0)


def prelu(x, slope):
    return jnp.where(x >= 0.0, x, slope.reshape(1, -1, 1, 1) * x)


def instance_norm(x, eps=1e-5):
    m = jnp.mean(x, axis=(2, 3), keepdims=True)
    v = jnp.mean((x - m) ** 2, axis=(2, 3), keepdims=True)
    return (x - m) / jnp.sqrt(v + eps)


def _resize_axis_idx(out_size, in_size, scale_inv):
    i = jnp.arange(out_size, dtype=jnp.float32)
    src = scale_inv * (i + 0.5) - 0.5
    src = jnp.maximum(src, 0.0)
    i0 = jnp.minimum(jnp.floor(src).astype(jnp.int32), in_size - 1)
    i1 = jnp.minimum(i0 + 1, in_size - 1)
    lam = src - i0.astype(jnp.float32)
    return i0, i1, lam


def resize(x, scale_factor):
    """F.interpolate(mode='bilinear', align_corners=False, scale_factor=sf)."""
    B, C, H, W = x.shape
    out_h = int(math.floor(H * scale_factor))
    out_w = int(math.floor(W * scale_factor))
    if out_h == H and out_w == W:
        return x
    y0, y1, ly = _resize_axis_idx(out_h, H, 1.0 / scale_factor)
    x0, x1, lx = _resize_axis_idx(out_w, W, 1.0 / scale_factor)
    rows = (x[:, :, y0, :] * (1.0 - ly)[None, None, :, None]
            + x[:, :, y1, :] * ly[None, None, :, None])
    out = (rows[:, :, :, x0] * (1.0 - lx)[None, None, None, :]
           + rows[:, :, :, x1] * lx[None, None, None, :])
    return out


def _bilinear_gather(img, px, py, padding):
    """Bilinear sample, align_corners=True, pixel-space coords (B,Hg,Wg)."""
    # TODO(synk): data-dependent gather kept in plain JAX (no rectangular
    # Pallas tiling for grid_sample at these sizes).
    B, C, H, W = img.shape
    if padding == 'border':
        px = jnp.clip(px, 0.0, W - 1.0)
        py = jnp.clip(py, 0.0, H - 1.0)
    x0 = jnp.floor(px)
    y0 = jnp.floor(py)
    x1 = x0 + 1.0
    y1 = y0 + 1.0
    w00 = (x1 - px) * (y1 - py)
    w01 = (px - x0) * (y1 - py)
    w10 = (x1 - px) * (py - y0)
    w11 = (px - x0) * (py - y0)
    img_nhwc = jnp.transpose(img, (0, 2, 3, 1))
    bidx = jnp.arange(B)[:, None, None]

    def gather(ix, iy):
        ok = (ix >= 0) & (ix <= W - 1) & (iy >= 0) & (iy <= H - 1)
        ixc = jnp.clip(ix, 0, W - 1).astype(jnp.int32)
        iyc = jnp.clip(iy, 0, H - 1).astype(jnp.int32)
        v = img_nhwc[bidx, iyc, ixc]            # (B, Hg, Wg, C)
        if padding == 'zeros':
            v = v * ok[..., None].astype(v.dtype)
        return v

    out = (gather(x0, y0) * w00[..., None] + gather(x1, y0) * w01[..., None]
           + gather(x0, y1) * w10[..., None] + gather(x1, y1) * w11[..., None])
    return jnp.transpose(out, (0, 3, 1, 2))


def warp(img, flow):
    """AMT warp(): grid_sample(bilinear, border padding, align_corners=True)."""
    B, C, H, W = img.shape
    gx = jnp.broadcast_to(jnp.linspace(-1.0, 1.0, W)[None, None, :], (B, H, W))
    gy = jnp.broadcast_to(jnp.linspace(-1.0, 1.0, H)[None, :, None], (B, H, W))
    gx = gx + flow[:, 0] / ((W - 1.0) / 2.0)
    gy = gy + flow[:, 1] / ((H - 1.0) / 2.0)
    px = (gx + 1.0) * 0.5 * (W - 1)
    py = (gy + 1.0) * 0.5 * (H - 1)
    return _bilinear_gather(img, px, py, padding='border')


def avg_pool2(x):
    B, C, H, W = x.shape
    return x.reshape(B, C, H // 2, 2, W // 2, 2).mean(axis=(3, 5))


def coords_grid(b, ht, wd):
    ys, xs = jnp.meshgrid(jnp.arange(ht, dtype=jnp.float32),
                          jnp.arange(wd, dtype=jnp.float32), indexing='ij')
    return jnp.broadcast_to(jnp.stack([xs, ys], 0)[None], (b, 2, ht, wd))


# ----------------------------------------------------------------------------
# Bidirectional correlation block (corr matmul runs on the Pallas MXU kernel)
# ----------------------------------------------------------------------------
class BidirCorrBlock:
    def __init__(self, fmap0, fmap1, num_levels=4, radius=3):
        b, dim, h, w = fmap0.shape
        scale = 1.0 / math.sqrt(dim)                    # folded into operand
        f0 = jnp.transpose(fmap0, (0, 2, 3, 1)).reshape(b, h * w, dim) * scale
        f1 = fmap1.reshape(b, dim, h * w)
        # TODO(synk): per-image loop (batch is tiny); could be one batched call.
        corr = jnp.stack([matmul_plain(f0[i], f1[i]) for i in range(b)], 0)
        corr_T = jnp.transpose(corr, (0, 2, 1))
        c = corr.reshape(b * h * w, 1, h, w)
        cT = corr_T.reshape(b * h * w, 1, h, w)
        self.pyr, self.pyrT = [c], [cT]
        for _ in range(num_levels - 1):
            c = avg_pool2(c)
            cT = avg_pool2(cT)
            self.pyr.append(c)
            self.pyrT.append(cT)
        self.num_levels = num_levels
        self.radius = radius

    def __call__(self, coords0, coords1):
        r = self.radius
        b, _, h1, w1 = coords0.shape
        c0 = jnp.transpose(coords0, (0, 2, 3, 1)).reshape(b * h1 * w1, 1, 1, 2)
        c1 = jnp.transpose(coords1, (0, 2, 3, 1)).reshape(b * h1 * w1, 1, 1, 2)
        d = jnp.linspace(-r, r, 2 * r + 1)
        dyy, dxx = jnp.meshgrid(d, d, indexing='ij')      # RAFT quirk: (dy, dx)
        delta = jnp.stack([dyy, dxx], -1).reshape(1, 2 * r + 1, 2 * r + 1, 2)
        outs, outsT = [], []
        for i in range(self.num_levels):
            cl0 = c0 / (2 ** i) + delta
            cl1 = c1 / (2 ** i) + delta
            s0 = _bilinear_gather(self.pyr[i], cl0[..., 0], cl0[..., 1], 'zeros')
            s1 = _bilinear_gather(self.pyrT[i], cl1[..., 0], cl1[..., 1], 'zeros')
            outs.append(s0.reshape(b, h1, w1, -1))
            outsT.append(s1.reshape(b, h1, w1, -1))
        out = jnp.concatenate(outs, -1)
        outT = jnp.concatenate(outsT, -1)
        return (jnp.transpose(out, (0, 3, 1, 2)),
                jnp.transpose(outT, (0, 3, 1, 2)))


# ----------------------------------------------------------------------------
# Deterministic parameter construction (packs weights at build time)
# ----------------------------------------------------------------------------
class PG:
    def __init__(self, seed=0):
        self.key = jax.random.PRNGKey(seed)
        self.i = 0

    def _nk(self):
        self.i += 1
        return jax.random.fold_in(self.key, self.i)

    def conv_raw(self, in_c, out_c, k):
        bound = 1.0 / math.sqrt(in_c * k * k)
        w = jax.random.uniform(self._nk(), (out_c, in_c, k, k), jnp.float32,
                               -bound, bound)
        b = jax.random.uniform(self._nk(), (out_c,), jnp.float32, -bound, bound)
        return w, b

    def conv(self, in_c, out_c, k, slope=None):
        w, b = self.conv_raw(in_c, out_c, k)
        return make_conv_pack(w, b, slope)

    def conv_lrelu(self, in_c, out_c, k):
        return self.conv(in_c, out_c, k, jnp.full((out_c,), 0.1, jnp.float32))

    def convrelu(self, in_c, out_c, k=3):
        return self.conv(in_c, out_c, k, self.prelu(out_c))

    def prelu(self, c):
        return jnp.full((c,), 0.25, jnp.float32)

    def deconv(self, in_c, out_c, k=4):
        """ConvTranspose2d(4,s=2,p=1) -> 4 sub-pixel parity conv packs."""
        bound = 1.0 / math.sqrt(out_c * k * k)
        w = jax.random.uniform(self._nk(), (in_c, out_c, k, k), jnp.float32,
                               -bound, bound)
        b = jax.random.uniform(self._nk(), (out_c,), jnp.float32, -bound, bound)
        taps = {'e': jnp.array([3, 1]), 'o': jnp.array([2, 0])}
        packs = {}
        for rp in ('e', 'o'):
            for cp in ('e', 'o'):
                w22 = w[:, :, taps[rp], :][:, :, :, taps[cp]]   # (in,out,2,2)
                packs[rp + cp] = make_conv_pack(
                    jnp.transpose(w22, (1, 0, 2, 3)), b, None)
        return packs

    def resblock(self, in_c, side):
        return {'c1': self.convrelu(in_c, in_c), 'c2': self.convrelu(side, side),
                'c3': self.convrelu(in_c, in_c), 'c4': self.convrelu(side, side),
                'c5': self.conv(in_c, in_c, 3), 'slope': self.prelu(in_c)}


def resblock_fwd(p, x, side):
    out = conv2d(x, p['c1'], 1, 1)
    res, sd = out[:, :-side], out[:, -side:]
    sd = conv2d(sd, p['c2'], 1, 1)
    out = conv2d(jnp.concatenate([res, sd], 1), p['c3'], 1, 1)
    res, sd = out[:, :-side], out[:, -side:]
    sd = conv2d(sd, p['c4'], 1, 1)
    out = conv2d(jnp.concatenate([res, sd], 1), p['c5'], 1, 1)
    return prelu(x + out, p['slope'])


# ---- BasicEncoder (RAFT-style, instance norm) --------------------------------
def make_raft_resblock(pg, inp, planes, stride):
    d = {'conv1': pg.conv(inp, planes, 3), 'conv2': pg.conv(planes, planes, 3),
         'stride': stride}
    if stride != 1:
        d['down'] = pg.conv(inp, planes, 1)
    return d


def raft_resblock_fwd(p, x):
    y = relu(instance_norm(conv2d(x, p['conv1'], p['stride'], 1)))
    y = relu(instance_norm(conv2d(y, p['conv2'], 1, 1)))
    if p['stride'] != 1:
        x = instance_norm(conv2d(x, p['down'], p['stride'], 0))
    return relu(x + y)


def make_basic_encoder(pg, output_dim=128):
    return {'conv1': pg.conv(3, 64, 7),
            'layer1': [make_raft_resblock(pg, 64, 64, 1),
                       make_raft_resblock(pg, 64, 64, 1)],
            'layer2': [make_raft_resblock(pg, 64, 72, 2),
                       make_raft_resblock(pg, 72, 72, 1)],
            'layer3': [make_raft_resblock(pg, 72, 128, 2),
                       make_raft_resblock(pg, 128, 128, 1)],
            'conv2': pg.conv(128, output_dim, 1)}


def basic_encoder_fwd(p, xs):
    n = xs[0].shape[0]
    x = jnp.concatenate(xs, 0)
    x = relu(instance_norm(conv2d(x, p['conv1'], 2, 3)))
    for blk in p['layer1'] + p['layer2'] + p['layer3']:
        x = raft_resblock_fwd(blk, x)
    x = conv2d(x, p['conv2'], 1, 0)
    return x[:n], x[n:]


# ---- Context encoder pyramid --------------------------------------------------
def make_encoder(pg, channels, large=True):
    prev, levels = 3, []
    for idx, ch in enumerate(channels):
        k = 7 if (large and idx == 0) else 3
        levels.append({'k': k, 'c0': pg.convrelu(prev, ch, k),
                       'c1': pg.convrelu(ch, ch, 3)})
        prev = ch
    return levels


def encoder_fwd(levels, x):
    fs = []
    for lv in levels:
        pad = 3 if lv['k'] == 7 else 1
        x = conv2d(x, lv['c0'], stride=2, padding=pad)
        x = conv2d(x, lv['c1'], stride=1, padding=1)
        fs.append(x)
    return fs


# ---- Decoders -----------------------------------------------------------------
def make_init_decoder(pg, in_ch, out_ch, skip):
    return {'c0': pg.convrelu(in_ch * 2 + 1, in_ch * 2, 3),
            'rb': pg.resblock(in_ch * 2, skip),
            'up': pg.deconv(in_ch * 2, out_ch + 4), 'skip': skip}


def init_decoder_fwd(p, f0, f1, embt):
    b, _, h, w = f0.shape
    embt_map = jnp.broadcast_to(embt, (b, 1, h, w))
    x = conv2d(jnp.concatenate([f0, f1, embt_map], 1), p['c0'], 1, 1)
    x = resblock_fwd(p['rb'], x, p['skip'])
    out = deconv4x4_s2(x, p['up'])
    return out[:, 0:2], out[:, 2:4], out[:, 4:]


def make_inter_decoder(pg, in_ch, out_ch, skip):
    return {'c0': pg.convrelu(in_ch * 3 + 4, in_ch * 3, 3),
            'rb': pg.resblock(in_ch * 3, skip),
            'up': pg.deconv(in_ch * 3, out_ch + 4), 'skip': skip}


def inter_decoder_fwd(p, ft_, f0, f1, flow0_in, flow1_in):
    f0w = warp(f0, flow0_in)
    f1w = warp(f1, flow1_in)
    x = conv2d(jnp.concatenate([ft_, f0w, f1w, flow0_in, flow1_in], 1),
               p['c0'], 1, 1)
    x = resblock_fwd(p['rb'], x, p['skip'])
    out = deconv4x4_s2(x, p['up'])
    flow0 = out[:, 0:2] + 2.0 * resize(flow0_in, 2.0)
    flow1 = out[:, 2:4] + 2.0 * resize(flow1_in, 2.0)
    return flow0, flow1, out[:, 4:]


def make_mf_decoder(pg, in_ch, skip, nf):
    return {'c0': pg.convrelu(in_ch * 3 + 4, in_ch * 3, 3),
            'rb': pg.resblock(in_ch * 3, skip),
            'up': pg.deconv(in_ch * 3, 8 * nf), 'skip': skip, 'nf': nf}


def mf_decoder_fwd(p, ft_, f0, f1, flow0, flow1):
    nf = p['nf']
    f0w = warp(f0, flow0)
    f1w = warp(f1, flow1)
    x = conv2d(jnp.concatenate([ft_, f0w, f1w, flow0, flow1], 1), p['c0'], 1, 1)
    x = resblock_fwd(p['rb'], x, p['skip'])
    out = deconv4x4_s2(x, p['up'])
    d0, d1 = out[:, :2 * nf], out[:, 2 * nf:4 * nf]
    mask = jax.nn.sigmoid(out[:, 4 * nf:5 * nf])
    img_res = out[:, 5 * nf:]
    flow0_out = d0 + jnp.tile(2.0 * resize(flow0, 2.0), (1, nf, 1, 1))
    flow1_out = d1 + jnp.tile(2.0 * resize(flow1, 2.0), (1, nf, 1, 1))
    return flow0_out, flow1_out, mask, img_res


# ---- BasicUpdateBlock ----------------------------------------------------------
def make_update_block(pg, cdim, hidden=128, flow_dim=48, corr_dim=256,
                      corr_dim2=160, fc_dim=124, corr_levels=4, radius=3,
                      scale_factor=None):
    cor_planes = 2 * (corr_levels * (2 * radius + 1) ** 2)
    # Fused feat0/flow0 heads (same input, same 3x3/LeakyReLU) -> one 256-wide conv
    wf, bf = pg.conv_raw(hidden, hidden, 3)
    wl, bl = pg.conv_raw(hidden, hidden, 3)
    featflow0 = make_conv_pack(jnp.concatenate([wf, wl], 0),
                               jnp.concatenate([bf, bl], 0),
                               jnp.full((2 * hidden,), 0.1, jnp.float32))
    return {'scale': scale_factor, 'hidden': hidden,
            'convc1': pg.conv_lrelu(cor_planes, corr_dim, 1),
            'convc2': pg.conv_lrelu(corr_dim, corr_dim2, 3),
            'convf1': pg.conv_lrelu(4, flow_dim * 2, 7),
            'convf2': pg.conv_lrelu(flow_dim * 2, flow_dim, 3),
            'conv': pg.conv_lrelu(flow_dim + corr_dim2, fc_dim, 3),
            'gru0': pg.conv_lrelu(fc_dim + 4 + cdim, hidden, 3),
            'gru1': pg.conv(hidden, hidden, 3),
            'featflow0': featflow0,
            'feat1': pg.conv(hidden, cdim, 3),
            'flow1': pg.conv(hidden, 4, 3)}


def update_block_fwd(p, net, flow, corr):
    if p['scale'] is not None:
        net = resize(net, 1.0 / p['scale'])
    cor = conv2d(corr, p['convc1'], 1, 0)
    cor = conv2d(cor, p['convc2'], 1, 1)
    flo = conv2d(flow, p['convf1'], 1, 3)
    flo = conv2d(flo, p['convf2'], 1, 1)
    inp = conv2d(jnp.concatenate([cor, flo], 1), p['conv'], 1, 1)
    inp = jnp.concatenate([inp, flow, net], 1)
    out = conv2d(conv2d(inp, p['gru0'], 1, 1), p['gru1'], 1, 1)
    hf = p['hidden']
    ff = conv2d(out, p['featflow0'], 1, 1)          # fused feat0 + flow0
    dnet = conv2d(ff[:, :hf], p['feat1'], 1, 1)
    dflow = conv2d(ff[:, hf:], p['flow1'], 1, 1)
    if p['scale'] is not None:
        dnet = resize(dnet, p['scale'])
        dflow = p['scale'] * resize(dflow, p['scale'])
    return dnet, dflow


# ---- multi_flow_combine --------------------------------------------------------
def multi_flow_combine(P, img0, img1, flow0, flow1, mask, img_res, mean):
    b, c, h, w = flow0.shape
    nf = c // 2
    flow0 = flow0.reshape(b * nf, 2, h, w)
    flow1 = flow1.reshape(b * nf, 2, h, w)
    mask = mask.reshape(b * nf, 1, h, w)
    img_res = img_res.reshape(b * nf, 3, h, w)
    img0r = jnp.repeat(img0[:, None], nf, axis=1).reshape(b * nf, 3, h, w)
    img1r = jnp.repeat(img1[:, None], nf, axis=1).reshape(b * nf, 3, h, w)
    meanr = jnp.repeat(mean[:, None], nf, axis=1).reshape(b * nf, 1, 1, 1)
    i0w = warp(img0r, flow0)
    i1w = warp(img1r, flow1)
    img_warps = mask * i0w + (1.0 - mask) * i1w + meanr + img_res
    img_warps5 = img_warps.reshape(b, nf, 3, h, w)
    comb_in = img_warps5.reshape(b, nf * 3, h, w)
    y = conv2d(comb_in, P['comb0'], 1, 3)
    y = conv2d(y, P['comb1'], 1, 3)
    return img_warps5.mean(axis=1) + y


# ----------------------------------------------------------------------------
# Full AMT-L model
# ----------------------------------------------------------------------------
def make_model_params(seed=0, corr_radius=3, corr_lvls=4, num_flows=5,
                      channels=(48, 64, 72, 128), skip=48):
    pg = PG(seed)
    return {
        'radius': corr_radius, 'corr_levels': corr_lvls, 'num_flows': num_flows,
        'feat_encoder': make_basic_encoder(pg, 128),
        'encoder': make_encoder(pg, list(channels), large=True),
        'decoder4': make_init_decoder(pg, channels[3], channels[2], skip),
        'decoder3': make_inter_decoder(pg, channels[2], channels[1], skip),
        'decoder2': make_inter_decoder(pg, channels[1], channels[0], skip),
        'decoder1': make_mf_decoder(pg, channels[0], skip, num_flows),
        'update4': make_update_block(pg, 72, corr_levels=corr_lvls,
                                     radius=corr_radius, scale_factor=None),
        'update3': make_update_block(pg, 64, corr_levels=corr_lvls,
                                     radius=corr_radius, scale_factor=2.0),
        'update2': make_update_block(pg, 48, corr_levels=corr_lvls,
                                     radius=corr_radius, scale_factor=4.0),
        'comb0': pg.conv(3 * num_flows, 6 * num_flows, 7, pg.prelu(6 * num_flows)),
        'comb1': pg.conv(6 * num_flows, 3, 7),
    }


def _corr_scale_lookup(corr_fn, coord, flow0, flow1, embt, downsample=1):
    t1_scale = 1.0 / embt
    t0_scale = 1.0 / (1.0 - embt)
    if downsample != 1:
        inv = 1.0 / downsample
        flow0 = inv * resize(flow0, inv)
        flow1 = inv * resize(flow1, inv)
    corr0, corr1 = corr_fn(coord + flow1 * t1_scale, coord + flow0 * t0_scale)
    corr = jnp.concatenate([corr0, corr1], 1)
    flow = jnp.concatenate([flow0, flow1], 1)
    return corr, flow


def model_forward(P, img0, img1, embt, scale_factor=1.0, eval_mode=False):
    mean_ = jnp.concatenate([img0, img1], 2).mean(axis=1, keepdims=True)\
                                            .mean(axis=2, keepdims=True)\
                                            .mean(axis=3, keepdims=True)
    img0 = img0 - mean_
    img1 = img1 - mean_
    img0_ = img0 if scale_factor == 1.0 else resize(img0, scale_factor)
    img1_ = img1 if scale_factor == 1.0 else resize(img1, scale_factor)
    b, _, h, w = img0_.shape
    coord = coords_grid(b, h // 8, w // 8)

    fmap0, fmap1 = basic_encoder_fwd(P['feat_encoder'], [img0_, img1_])
    corr_fn = BidirCorrBlock(fmap0, fmap1, num_levels=P['corr_levels'],
                             radius=P['radius'])

    # both images through the context pyramid in one batched pass
    f_levels = encoder_fwd(P['encoder'], jnp.concatenate([img0_, img1_], 0))
    f0_1, f0_2, f0_3, f0_4 = [f[:b] for f in f_levels]
    f1_1, f1_2, f1_3, f1_4 = [f[b:] for f in f_levels]

    up_flow0_4, up_flow1_4, ft_3_ = init_decoder_fwd(P['decoder4'], f0_4, f1_4, embt)
    corr_4, flow_4 = _corr_scale_lookup(corr_fn, coord, up_flow0_4, up_flow1_4,
                                        embt, downsample=1)
    delta_ft_3_, delta_flow_4 = update_block_fwd(P['update4'], ft_3_, flow_4, corr_4)
    up_flow0_4 = up_flow0_4 + delta_flow_4[:, 0:2]
    up_flow1_4 = up_flow1_4 + delta_flow_4[:, 2:4]
    ft_3_ = ft_3_ + delta_ft_3_

    up_flow0_3, up_flow1_3, ft_2_ = inter_decoder_fwd(P['decoder3'], ft_3_, f0_3,
                                                      f1_3, up_flow0_4, up_flow1_4)
    corr_3, flow_3 = _corr_scale_lookup(corr_fn, coord, up_flow0_3, up_flow1_3,
                                        embt, downsample=2)
    delta_ft_2_, delta_flow_3 = update_block_fwd(P['update3'], ft_2_, flow_3, corr_3)
    up_flow0_3 = up_flow0_3 + delta_flow_3[:, 0:2]
    up_flow1_3 = up_flow1_3 + delta_flow_3[:, 2:4]
    ft_2_ = ft_2_ + delta_ft_2_

    up_flow0_2, up_flow1_2, ft_1_ = inter_decoder_fwd(P['decoder2'], ft_2_, f0_2,
                                                      f1_2, up_flow0_3, up_flow1_3)
    corr_2, flow_2 = _corr_scale_lookup(corr_fn, coord, up_flow0_2, up_flow1_2,
                                        embt, downsample=4)
    delta_ft_1_, delta_flow_2 = update_block_fwd(P['update2'], ft_1_, flow_2, corr_2)
    up_flow0_2 = up_flow0_2 + delta_flow_2[:, 0:2]
    up_flow1_2 = up_flow1_2 + delta_flow_2[:, 2:4]
    ft_1_ = ft_1_ + delta_ft_1_

    up_flow0_1, up_flow1_1, mask, img_res = mf_decoder_fwd(
        P['decoder1'], ft_1_, f0_1, f1_1, up_flow0_2, up_flow1_2)

    if scale_factor != 1.0:
        up_flow0_1 = resize(up_flow0_1, 1.0 / scale_factor) * (1.0 / scale_factor)
        up_flow1_1 = resize(up_flow1_1, 1.0 / scale_factor) * (1.0 / scale_factor)
        mask = resize(mask, 1.0 / scale_factor)
        img_res = resize(img_res, 1.0 / scale_factor)

    imgt_pred = multi_flow_combine(P, img0, img1, up_flow0_1, up_flow1_1,
                                   mask, img_res, mean_)
    imgt_pred = jnp.clip(imgt_pred, 0.0, 1.0)

    if eval_mode:
        return {'imgt_pred': imgt_pred}
    nf = P['num_flows']
    H_full, W_full = img0.shape[2], img0.shape[3]
    up_flow0_1 = up_flow0_1.reshape(b, nf, 2, H_full, W_full)
    up_flow1_1 = up_flow1_1.reshape(b, nf, 2, H_full, W_full)
    return {'imgt_pred': imgt_pred,
            'flow0_pred': [up_flow0_1, up_flow0_2, up_flow0_3, up_flow0_4],
            'flow1_pred': [up_flow1_1, up_flow1_2, up_flow1_3, up_flow1_4],
            'ft_pred': [ft_1_, ft_2_, ft_3_]}


# ----------------------------------------------------------------------------
if __name__ == "__main__":
    key = jax.random.PRNGKey(0)
    k0, k1 = jax.random.split(key)
    # H, W must be >= 128 (divisible by 64) so all 4 correlation-pyramid levels
    # stay non-degenerate (>1 px), matching AMT's padding requirements.
    B, H, W = 1, 128, 128
    img0 = jax.random.uniform(k0, (B, 3, H, W), jnp.float32)
    img1 = jax.random.uniform(k1, (B, 3, H, W), jnp.float32)
    embt = jnp.full((B, 1, 1, 1), 0.5, jnp.float32)

    params = make_model_params(seed=0)
    out = model_forward(params, img0, img1, embt, scale_factor=1.0, eval_mode=False)
    jax.block_until_ready(out['imgt_pred'])

    assert out['imgt_pred'].shape == (B, 3, H, W)
    assert out['flow0_pred'][0].shape == (B, 5, 2, H, W)
    assert out['ft_pred'][0].shape[1] == 48
    print("KERNEL_OK")
</pallas_src>

<mosaic_0001>
module attributes {stable_mosaic.version = 11 : i64} {
  func.func @_mm_bias_act_kernel(%arg0: i32, %arg1: i32, %arg2: i32, %arg3: memref<512x256xbf16, #tpu.memory_space<vmem>>, %arg4: memref<256x128xbf16, #tpu.memory_space<vmem>>, %arg5: memref<1x128xf32, #tpu.memory_space<vmem>>, %arg6: memref<1x128xf32, #tpu.memory_space<vmem>>, %arg7: memref<512x128xf32, #tpu.memory_space<vmem>>, %arg8: memref<512x128xf32, #tpu.memory_space<vmem>>) attributes {dimension_semantics = [#tpu.dimension_semantics<parallel>, #tpu.dimension_semantics<parallel>, #tpu.dimension_semantics<arbitrary>], iteration_bounds = array<i64: 16, 1, 1>, scalar_prefetch = 0 : i64, scratch_operands = 1 : i64, tpu.core_type = #tpu.core_type<tc>, window_params = [{transform_indices = @transform_0, window_bounds = array<i64: 512, 256>}, {transform_indices = @transform_1, window_bounds = array<i64: 256, 128>}, {transform_indices = @transform_2, window_bounds = array<i64: 1, 128>}, {transform_indices = @transform_3, window_bounds = array<i64: 1, 128>}, {transform_indices = @transform_4, window_bounds = array<i64: 512, 128>}]} {
    %c0_i32 = arith.constant 0 : i32
    %0 = arith.cmpi eq, %arg2, %c0_i32 : i32
    %1 = arith.extui %0 : i1 to i32
    %c0_i32_0 = arith.constant 0 : i32
    %2 = arith.cmpi ne, %1, %c0_i32_0 : i32
    scf.if %2 {
      %cst_10 = arith.constant 0.000000e+00 : f32
      %12 = vector.broadcast %cst_10 : f32 to vector<512x128xf32>
      %c0_11 = arith.constant 0 : index
      %c0_12 = arith.constant 0 : index
      %13 = vector.load %arg8[%c0_11, %c0_12] : memref<512x128xf32, #tpu.memory_space<vmem>>, vector<512x128xf32>
      tpu.vector_store %arg8[%c0_11, %c0_12], %12 {strides = array<i32>} : memref<512x128xf32, #tpu.memory_space<vmem>>, vector<512x128xf32>,
    } else {
    }
    %c0 = arith.constant 0 : index
    %c0_1 = arith.constant 0 : index
    %3 = vector.load %arg8[%c0, %c0_1] : memref<512x128xf32, #tpu.memory_space<vmem>>, vector<512x128xf32>
    %c0_2 = arith.constant 0 : index
    %c0_3 = arith.constant 0 : index
    %4 = vector.load %arg3[%c0_2, %c0_3] : memref<512x256xbf16, #tpu.memory_space<vmem>>, vector<512x256xbf16>
    %c0_4 = arith.constant 0 : index
    %c0_5 = arith.constant 0 : index
    %5 = vector.load %arg4[%c0_4, %c0_5] : memref<256x128xbf16, #tpu.memory_space<vmem>>, vector<256x128xbf16>
    %cst = arith.constant dense<0.000000e+00> : vector<512x128xf32>
    %6 = tpu.matmul %4, %5, %cst {dimension_numbers = #tpu.dot_dimension_numbers<[1], [0], [0], [1], [0, 0, 1, 1], [], []>} : vector<512x256xbf16>, vector<256x128xbf16>, vector<512x128xf32> -> vector<512x128xf32>
    %7 = arith.addf %3, %6 : vector<512x128xf32>
    %c0_6 = arith.constant 0 : index
    %c0_7 = arith.constant 0 : index
    %8 = vector.load %arg8[%c0_6, %c0_7] : memref<512x128xf32, #tpu.memory_space<vmem>>, vector<512x128xf32>
    tpu.vector_store %arg8[%c0_6, %c0_7], %7 {strides = array<i32>} : memref<512x128xf32, #tpu.memory_space<vmem>>, vector<512x128xf32>,
    %c0_i32_8 = arith.constant 0 : i32
    %9 = arith.cmpi eq, %arg2, %c0_i32_8 : i32
    %10 = arith.extui %9 : i1 to i32
    %c0_i32_9 = arith.constant 0 : i32
    %11 = arith.cmpi ne, %10, %c0_i32_9 : i32
    scf.if %11 {
      %c0_10 = arith.constant 0 : index
      %c0_11 = arith.constant 0 : index
      %12 = vector.load %arg8[%c0_10, %c0_11] : memref<512x128xf32, #tpu.memory_space<vmem>>, vector<512x128xf32>
      %c0_12 = arith.constant 0 : index
      %c0_13 = arith.constant 0 : index
      %13 = vector.load %arg5[%c0_12, %c0_13] : memref<1x128xf32, #tpu.memory_space<vmem>>, vector<1x128xf32>
      %14 = vector.broadcast %13 : vector<1x128xf32> to vector<512x128xf32>
      %15 = arith.addf %12, %14 : vector<512x128xf32>
      %c0_14 = arith.constant 0 : index
      %c0_15 = arith.constant 0 : index
      %16 = vector.load %arg6[%c0_14, %c0_15] : memref<1x128xf32, #tpu.memory_space<vmem>>, vector<1x128xf32>
      %cst_16 = arith.constant 0.000000e+00 : f32
      %17 = vector.broadcast %cst_16 : f32 to vector<512x128xf32>
      %18 = arith.cmpf oge, %15, %17 : vector<512x128xf32>
      %19 = vector.broadcast %16 : vector<1x128xf32> to vector<512x128xf32>
      %20 = arith.mulf %19, %15 : vector<512x128xf32>
      %21 = arith.select %18, %15, %20 : vector<512x128xi1>, vector<512x128xf32>
      %c0_17 = arith.constant 0 : index
      %c0_18 = arith.constant 0 : index
      %22 = vector.load %arg7[%c0_17, %c0_18] : memref<512x128xf32, #tpu.memory_space<vmem>>, vector<512x128xf32>
      tpu.vector_store %arg7[%c0_17, %c0_18], %21 {strides = array<i32>} : memref<512x128xf32, #tpu.memory_space<vmem>>, vector<512x128xf32>,
    } else {
    }
    return
  }
  func.func @transform_0(%arg0: i32, %arg1: i32, %arg2: i32) -> (i32, i32) {
    %c0_i32 = arith.constant 0 : i32
    return %arg0, %arg2 : i32, i32
  }
  func.func @transform_1(%arg0: i32, %arg1: i32, %arg2: i32) -> (i32, i32) {
    %c0_i32 = arith.constant 0 : i32
    return %arg2, %arg1 : i32, i32
  }
  func.func @transform_2(%arg0: i32, %arg1: i32, %arg2: i32) -> (i32, i32) {
    %c0_i32 = arith.constant 0 : i32
    %c0_i32_0 = arith.constant 0 : i32
    return %c0_i32, %arg1 : i32, i32
  }
  func.func @transform_3(%arg0: i32, %arg1: i32, %arg2: i32) -> (i32, i32) {
    %c0_i32 = arith.constant 0 : i32
    %c0_i32_0 = arith.constant 0 : i32
    return %c0_i32, %arg1 : i32, i32
  }
  func.func @transform_4(%arg0: i32, %arg1: i32, %arg2: i32) -> (i32, i32) {
    %c0_i32 = arith.constant 0 : i32
    return %arg0, %arg1 : i32, i32
  }
}

</mosaic_0001>

<llo_original>
// kernel: tpu_custom_call.1
$region0: #{tpu_custom_call.1}
  #allocation0 [shape = 'u32[]', space=smem, size = 0x4, offset = 0x4, fixed_abs, tag = 'smem constant byte address 0x4 - core index']
  #allocation1 [shape = 'u32[72,128]{1,0:T(1,128)}', space=vmem, size = 0x9000, scoped, tag = 'internal scratch']
  #allocation2 [shape = 'f32[512,128]{1,0:T(8,128)}', space=vmem, size = 0x40000, scoped, tag = 'scratch operand']
  %s0 = inlined_call_operand.hbm [shape: bf16[8192,256], index: 0, kind: input, shape index: {}]
  %s1 = inlined_call_operand.hbm [shape: bf16[256,128], index: 1, kind: input, shape index: {}]
  %s2 = inlined_call_operand.hbm [shape: f32[1,128], index: 2, kind: input, shape index: {}]
  %s3 = inlined_call_operand.hbm [shape: f32[1,128], index: 3, kind: input, shape index: {}]
  %s4 = inlined_call_operand.hbm [shape: f32[8192,128], index: 4, kind: output, shape index: {}]
  %s5 = sld [smem:[#allocation0]]
  $region73: #{tpu_custom_call.1} parent=0
    _
  %s7 = ssub.s32 1, %s5
  %s8 = scalar_select 0, %s7, %s5
  $region1: #{tpu_custom_call.1} parent=0
    #allocation3 [shape = 'u8[524288]{0}', space=vmem, size = 0x80000, scoped, tag = 'input window, operand 0']
    #allocation4 [shape = 's32[2]{0}', space=sflag, size = 0x8, scoped, tag = 'scoped memory for tpu_custom_call.1']
    #allocation5 [shape = 's32[2]{0}', space=sflag, size = 0x8, scoped, tag = 'scoped memory for tpu_custom_call.1']
    #allocation6 [shape = 'u8[65536]{0}', space=vmem, size = 0x10000, scoped, tag = 'input window, operand 1, single buffered']
    #allocation7 [shape = 's32[1]{0}', space=sflag, size = 0x4, scoped, tag = 'scoped memory for tpu_custom_call.1']
    #allocation8 [shape = 'u8[512]{0}', space=vmem, size = 0x400, scoped, tag = 'input window, operand 2, single buffered']
    #allocation9 [shape = 'u8[512]{0}', space=vmem, size = 0x400, scoped, tag = 'input window, operand 3, single buffered']
    #allocation10 [shape = 's32[1]{0}', space=sflag, size = 0x4, scoped, tag = 'scoped memory for tpu_custom_call.1']
    #allocation11 [shape = 'u8[524288]{0}', space=vmem, size = 0x80000, scoped, tag = 'output window, operand 0']
    %9 = vsyncpa [#allocation4], 0
    %s10 = scalar_lea.sflag [#allocation4], 1
    %11 = vsyncpa %s10, 0
    %12 = vsyncpa [#allocation7], 0
    %13 = vsyncpa [#allocation10], 0
    %14 = vsyncpa [#allocation5], 0
    %s15 = scalar_lea.sflag [#allocation5], 1
    %16 = vsyncpa %s15, 0
    loop: start=0, step=1, limit=18
    $region2: #{tpu_custom_call.1} parent=1 // loop_pre_header
      _
    $region3: #{tpu_custom_call.1} parent=1 // loop_header
      %s18 = sphi 0, %s22
      %p19 = scmp.ge.s32.totalorder %s18, 18
      %s25 = sphi 0, %s44
      %s26 = sphi 0, %s40
      %s27 = sphi 0, %s36
      %s28 = sphi 0, %s25
      %s29 = sphi 0, %s26
      %s30 = sphi 0, %s27
      %s31 = sphi 0, %s28
      %s32 = sphi 0, %s29
      %s33 = sphi 0, %s30
      %s49 = sphi 0, %s51
      %s52 = sphi 0, %s49
      %s53 = sphi 0, %s52
      %s69 = sphi 0, %s53
      %s77 = sphi 0, %s79
      %s80 = sphi 0, %s77
      %s81 = sphi 0, %s80
      %s97 = sphi 0, %s81
      %s103 = sphi 0, %s105
      %s106 = sphi 0, %s103
      %s107 = sphi 0, %s106
      %s123 = sphi 0, %s107
      %s129 = sphi 0, %s131
      %s132 = sphi 0, %s129
      %s133 = sphi 0, %s132
      %s149 = sphi 0, %s133
      %s157 = sphi 0, %s159
      %s160 = sphi 0, %s157
      %s161 = sphi 0, %s160
      %s177 = sphi 0, %s161
    $region4: #{tpu_custom_call.1} parent=1 // loop_header_branch
      %21 = sbr.rel (%p19) target = $region8
    $region5: #{tpu_custom_call.1} parent=1 // loop_body
      %s23 = ssub.s32 %s18, 1
      %s24 = ssub.s32 %s18, 2
      %s34 = sadd.s32 1, %s27
      %p35 = scmp.ge.s32.totalorder %s34, 1
      %s36 = scalar_select %p35, 0, %s34
      %s37 = sadd.s32 1, %s26
      %s38 = scalar_select %p35, %s37, %s26
      %p39 = scmp.ge.s32.totalorder %s38, 1
      %s40 = scalar_select %p39, 0, %s38
      %s41 = sadd.s32 1, %s25
      %s42 = scalar_select %p39, %s41, %s25
      %p43 = scmp.ge.s32.totalorder %s42, 16
      %s44 = scalar_select %p43, 0, %s42
      %s45 = ssub.s32 %s25, %s44
      %s46 = ssub.s32 %s27, %s36
      %s47 = sor.u32 %s45, %s46
      %p48 = scmp.eq.s32.totalorder %s47, 0
      %s50 = sadd.s32 %s49, 1
      %s51 = scalar_select %p48, %s49, %s50
      %p54 = pneg %p48
      %p55 = scmp.eq.s32.totalorder %s18, 15
      %p56 = por %p54, %p55
      %p57 = scmp.ne.s32.totalorder %s49, %s52
      %p58 = scmp.eq.s32.totalorder %s18, 0
      %p59 = por %p57, %p58
      %p60 = scmp.ne.s32.totalorder %s49, %s52
      %p61 = scmp.eq.s32.totalorder %s23, 15
      %p62 = por %p60, %p61
      %p63 = scmp.ne.s32.totalorder %s52, %s53
      %p64 = scmp.eq.s32.totalorder %s23, 0
      %p65 = por %p63, %p64
      %p66 = scmp.ne.s32.totalorder %s52, %s53
      %p67 = scmp.eq.s32.totalorder %s24, 15
      %p68 = por %p66, %p67
      %p70 = scmp.ne.s32.totalorder %s53, %s69
      %p71 = scmp.eq.s32.totalorder %s24, 0
      %p72 = por %p70, %p71
      %s73 = ssub.s32 %s27, %s36
      %s74 = ssub.s32 %s26, %s40
      %s75 = sor.u32 %s73, %s74
      %p76 = scmp.eq.s32.totalorder %s75, 0
      %s78 = sadd.s32 %s77, 1
      %s79 = scalar_select %p76, %s77, %s78
      %p82 = pneg %p76
      %p83 = scmp.eq.s32.totalorder %s18, 15
      %p84 = por %p82, %p83
      %p85 = scmp.ne.s32.totalorder %s77, %s80
      %p86 = scmp.eq.s32.totalorder %s18, 0
      %p87 = por %p85, %p86
      %p88 = scmp.ne.s32.totalorder %s77, %s80
      %p89 = scmp.eq.s32.totalorder %s23, 15
      %p90 = por %p88, %p89
      %p91 = scmp.ne.s32.totalorder %s80, %s81
      %p92 = scmp.eq.s32.totalorder %s23, 0
      %p93 = por %p91, %p92
      %p94 = scmp.ne.s32.totalorder %s80, %s81
      %p95 = scmp.eq.s32.totalorder %s24, 15
      %p96 = por %p94, %p95
      %p98 = scmp.ne.s32.totalorder %s81, %s97
      %p99 = scmp.eq.s32.totalorder %s24, 0
      %p100 = por %p98, %p99
      %s101 = ssub.s32 %s26, %s40
      %p102 = scmp.eq.s32.totalorder %s101, 0
      %s104 = sadd.s32 %s103, 1
      %s105 = scalar_select %p102, %s103, %s104
      %p108 = pneg %p102
      %p109 = scmp.eq.s32.totalorder %s18, 15
      %p110 = por %p108, %p109
      %p111 = scmp.ne.s32.totalorder %s103, %s106
      %p112 = scmp.eq.s32.totalorder %s18, 0
      %p113 = por %p111, %p112
      %p114 = scmp.ne.s32.totalorder %s103, %s106
      %p115 = scmp.eq.s32.totalorder %s23, 15
      %p116 = por %p114, %p115
      %p117 = scmp.ne.s32.totalorder %s106, %s107
      %p118 = scmp.eq.s32.totalorder %s23, 0
      %p119 = por %p117, %p118
      %p120 = scmp.ne.s32.totalorder %s106, %s107
      %p121 = scmp.eq.s32.totalorder %s24, 15
      %p122 = por %p120, %p121
      %p124 = scmp.ne.s32.totalorder %s107, %s123
      %p125 = scmp.eq.s32.totalorder %s24, 0
      %p126 = por %p124, %p125
      %s127 = ssub.s32 %s26, %s40
      %p128 = scmp.eq.s32.totalorder %s127, 0
      %s130 = sadd.s32 %s129, 1
      %s131 = scalar_select %p128, %s129, %s130
      %p134 = pneg %p128
      %p135 = scmp.eq.s32.totalorder %s18, 15
      %p136 = por %p134, %p135
      %p137 = scmp.ne.s32.totalorder %s129, %s132
      %p138 = scmp.eq.s32.totalorder %s18, 0
      %p139 = por %p137, %p138
      %p140 = scmp.ne.s32.totalorder %s129, %s132
      %p141 = scmp.eq.s32.totalorder %s23, 15
      %p142 = por %p140, %p141
      %p143 = scmp.ne.s32.totalorder %s132, %s133
      %p144 = scmp.eq.s32.totalorder %s23, 0
      %p145 = por %p143, %p144
      %p146 = scmp.ne.s32.totalorder %s132, %s133
      %p147 = scmp.eq.s32.totalorder %s24, 15
      %p148 = por %p146, %p147
      %p150 = scmp.ne.s32.totalorder %s133, %s149
      %p151 = scmp.eq.s32.totalorder %s24, 0
      %p152 = por %p150, %p151
      %s153 = ssub.s32 %s25, %s44
      %s154 = ssub.s32 %s26, %s40
      %s155 = sor.u32 %s153, %s154
      %p156 = scmp.eq.s32.totalorder %s155, 0
      %s158 = sadd.s32 %s157, 1
      %s159 = scalar_select %p156, %s157, %s158
      %p162 = pneg %p156
      %p163 = scmp.eq.s32.totalorder %s18, 15
      %p164 = por %p162, %p163
      %p165 = scmp.ne.s32.totalorder %s157, %s160
      %p166 = scmp.eq.s32.totalorder %s18, 0
      %p167 = por %p165, %p166
      %p168 = scmp.ne.s32.totalorder %s157, %s160
      %p169 = scmp.eq.s32.totalorder %s23, 15
      %p170 = por %p168, %p169
      %p171 = scmp.ne.s32.totalorder %s160, %s161
      %p172 = scmp.eq.s32.totalorder %s23, 0
      %p173 = por %p171, %p172
      %p174 = scmp.ne.s32.totalorder %s160, %s161
      %p175 = scmp.eq.s32.totalorder %s24, 15
      %p176 = por %p174, %p175
      %p178 = scmp.ne.s32.totalorder %s161, %s177
      %p179 = scmp.eq.s32.totalorder %s24, 0
      %p180 = por %p178, %p179
      %p181 = scmp.le.s32.totalorder 1, %s18
      %p182 = scmp.lt.s32.totalorder %s18, 17
      %p183 = pnand %p181, %p182
      %p184 = pneg %p183
      // Predicated region
      $region9: #{tpu_custom_call.1} parent=5 // pred_check
        _
      $region10: #{tpu_custom_call.1} parent=5 // pred_check_branch
        %186 = sbr.rel (%p183) target = $region12
      $region11: #{tpu_custom_call.1} parent=5 // pred_region
        %s187 = ssub.s32 %s18, 1
        // Predicated region
        $region13: #{tpu_custom_call.1} parent=11 // pred_check
          %p188 = pneg %p93
        $region14: #{tpu_custom_call.1} parent=11 // pred_check_branch
          %190 = sbr.rel (%p188) target = $region16
        $region15: #{tpu_custom_call.1} parent=11 // pred_region
          %s191 = smul.u32 32, %s30
          %193 = vsyncadd [#allocation7], 0
          %s194 = sadd.s32 %s29, %s191
          %s195 = smul.addr %s194, 4
          %s196 = scalar_lea.hbm %s1, %s195
          %s197 = sshll.u32 %s196, 4
          %s198 = int_to_ptr.hbm [resolvable:$true] %s197
          %s199 = sshll.u32 [#allocation6], 4
          %s200 = int_to_ptr.vmem [resolvable:$true] %s199
          %205 = dma.hbm_to_vmem [thread:$0]  %s198, 2048, %s200, [#allocation7], 64, 64, 4
        $region16: #{tpu_custom_call.1} parent=11 // pred_fallthru
          _
        // Predicated region
        $region17: #{tpu_custom_call.1} parent=11 // pred_check
          %p206 = pneg %p119
        $region18: #{tpu_custom_call.1} parent=11 // pred_check_branch
          %208 = sbr.rel (%p206) target = $region20
        $region19: #{tpu_custom_call.1} parent=11 // pred_region
          %210 = vsyncadd [#allocation7], 0
          %s211 = scalar_lea.hbm %s2, %s29
          %s213 = sshll.u32 %s211, 4
          %s214 = int_to_ptr.hbm [resolvable:$true] %s213
          %s215 = sshll.u32 [#allocation8], 4
          %s216 = int_to_ptr.vmem [resolvable:$true] %s215
          %218 = dma.hbm_to_vmem [thread:$0]  %s214, 16, %s216, [#allocation7]
        $region20: #{tpu_custom_call.1} parent=11 // pred_fallthru
          _
        // Predicated region
        $region21: #{tpu_custom_call.1} parent=11 // pred_check
          %p219 = pneg %p145
        $region22: #{tpu_custom_call.1} parent=11 // pred_check_branch
          %221 = sbr.rel (%p219) target = $region24
        $region23: #{tpu_custom_call.1} parent=11 // pred_region
          %223 = vsyncadd [#allocation10], 0
          %s224 = scalar_lea.hbm %s3, %s29
          %s226 = sshll.u32 %s224, 4
          %s227 = int_to_ptr.hbm [resolvable:$true] %s226
          %s228 = sshll.u32 [#allocation9], 4
          %s229 = int_to_ptr.vmem [resolvable:$true] %s228
          %231 = dma.hbm_to_vmem [thread:$0]  %s227, 16, %s229, [#allocation10]
        $region24: #{tpu_custom_call.1} parent=11 // pred_fallthru
          _
      $region12: #{tpu_custom_call.1} parent=5 // pred_fallthru
        _
      %p232 = scmp.lt.s32.totalorder %s18, 16
      // Predicated region
      $region25: #{tpu_custom_call.1} parent=5 // pred_check
        %p233 = pneg %p232
      $region26: #{tpu_custom_call.1} parent=5 // pred_check_branch
        %235 = sbr.rel (%p233) target = $region28
      $region27: #{tpu_custom_call.1} parent=5 // pred_region
        // Predicated region
        $region29: #{tpu_custom_call.1} parent=27 // pred_check
          %p236 = pneg %p59
        $region30: #{tpu_custom_call.1} parent=27 // pred_check_branch
          %238 = sbr.rel (%p236) target = $region32
        $region31: #{tpu_custom_call.1} parent=27 // pred_region
          %s239 = sand.u32 %s49, 1
          %s240 = scalar_lea.sflag [#allocation4], %s239
          %s241 = sand.u32 %s49, 1
          %s242 = smul.addr %s241, 512
          %s243 = scalar_lea.vmem [#allocation3], %s242
          %s244 = smul.u32 64, %s25
          %s245 = smul.u32 2, %s27
          %247 = vsyncadd %s240, 0
          %s248 = smul.addr %s244, 2
          %s249 = sadd.s32 %s245, %s248
          %s250 = smul.addr %s249, 4
          %s251 = scalar_lea.hbm %s0, %s250
          %s252 = sshll.u32 %s251, 4
          %s253 = int_to_ptr.hbm [resolvable:$true] %s252
          %s254 = sshll.u32 %s243, 4
          %s255 = int_to_ptr.vmem [resolvable:$true] %s254
          %260 = dma.hbm_to_vmem [thread:$0]  %s253, 8192, %s255, %s240, 128, 128, 8
        $region32: #{tpu_custom_call.1} parent=27 // pred_fallthru
          _
      $region28: #{tpu_custom_call.1} parent=5 // pred_fallthru
        _
      %p261 = scmp.le.s32.totalorder 1, %s18
      %p262 = scmp.lt.s32.totalorder %s18, 17
      %p263 = pnand %p261, %p262
      %p264 = pneg %p263
      // Predicated region
      $region33: #{tpu_custom_call.1} parent=5 // pred_check
        _
      $region34: #{tpu_custom_call.1} parent=5 // pred_check_branch
        %266 = sbr.rel (%p263) target = $region36
      $region35: #{tpu_custom_call.1} parent=5 // pred_region
        %s267 = ssub.s32 %s18, 1
        %s268 = sand.u32 %s52, 1
        %s269 = scalar_lea.sflag [#allocation4], %s268
        %s270 = sand.u32 %s52, 1
        %s271 = smul.addr %s270, 512
        %s272 = scalar_lea.vmem [#allocation3], %s271
        // Predicated region
        $region37: #{tpu_custom_call.1} parent=35 // pred_check
          %p273 = pneg %p65
        $region38: #{tpu_custom_call.1} parent=35 // pred_check_branch
          %275 = sbr.rel (%p273) target = $region40
        $region39: #{tpu_custom_call.1} parent=35 // pred_region
          %277 = dma.done %s269, 8192
        $region40: #{tpu_custom_call.1} parent=35 // pred_fallthru
          _
        // Predicated region
        $region41: #{tpu_custom_call.1} parent=35 // pred_check
          %p278 = pneg %p93
        $region42: #{tpu_custom_call.1} parent=35 // pred_check_branch
          %280 = sbr.rel (%p278) target = $region44
        $region43: #{tpu_custom_call.1} parent=35 // pred_region
          %282 = dma.done [#allocation7], 2048
        $region44: #{tpu_custom_call.1} parent=35 // pred_fallthru
          _
        // Predicated region
        $region45: #{tpu_custom_call.1} parent=35 // pred_check
          %p283 = pneg %p119
        $region46: #{tpu_custom_call.1} parent=35 // pred_check_branch
          %285 = sbr.rel (%p283) target = $region48
        $region47: #{tpu_custom_call.1} parent=35 // pred_region
          %287 = dma.done [#allocation7], 16
        $region48: #{tpu_custom_call.1} parent=35 // pred_fallthru
          _
        // Predicated region
        $region49: #{tpu_custom_call.1} parent=35 // pred_check
          %p288 = pneg %p145
        $region50: #{tpu_custom_call.1} parent=35 // pred_check_branch
          %290 = sbr.rel (%p288) target = $region52
        $region51: #{tpu_custom_call.1} parent=35 // pred_region
          %292 = dma.done [#allocation10], 16
        $region52: #{tpu_custom_call.1} parent=35 // pred_fallthru
          _
        %s293 = sand.u32 %s52, 1
        %s294 = scalar_lea.sflag [#allocation4], %s293
        %s295 = sand.u32 %s52, 1
        %s296 = smul.addr %s295, 512
        %s297 = scalar_lea.vmem [#allocation3], %s296
        %p298 = pneg %p65
        %p299 = pneg %p62
        %p300 = pneg %p93
        %p301 = pneg %p90
        %p302 = pneg %p119
        %p303 = pneg %p116
        %p304 = pneg %p145
        %p305 = pneg %p142
        %p306 = pneg %p173
        %p307 = pneg %p170
        %s308 = sand.u32 %s160, 1
        %s309 = scalar_lea.sflag [#allocation5], %s308
        %s310 = sand.u32 %s160, 1
        %s311 = smul.addr %s310, 512
        %s312 = scalar_lea.vmem [#allocation11], %s311
        %s313 = smul.u32 64, %s28
        %s314 = smul.u32 2, %s30
        %s315 = smul.u32 32, %s30
        %s316 = smul.u32 64, %s28
        %p317 = scmp.eq.s32.totalorder %s30, 0
        // Predicated region
        $region53: #{tpu_custom_call.1} parent=35 // pred_check
          %p318 = pneg %p317
        $region54: #{tpu_custom_call.1} parent=35 // pred_check_branch
          %320 = sbr.rel (%p318) target = $region56
        $region55: #{tpu_custom_call.1} parent=35 // pred_region
          %321 = vst [vmem:[#allocation2] sm:$0xff] 0.0
          %322 = vst [vmem:[#allocation2 + $0x8] sm:$0xff] 0.0
          %323 = vst [vmem:[#allocation2 + $0x10] sm:$0xff] 0.0
          %324 = vst [vmem:[#allocation2 + $0x18] sm:$0xff] 0.0
          %325 = vst [vmem:[#allocation2 + $0x20] sm:$0xff] 0.0
          %326 = vst [vmem:[#allocation2 + $0x28] sm:$0xff] 0.0
          %327 = vst [vmem:[#allocation2 + $0x30] sm:$0xff] 0.0
          %328 = vst [vmem:[#allocation2 + $0x38] sm:$0xff] 0.0
          %329 = vst [vmem:[#allocation2 + $0x40] sm:$0xff] 0.0
          %330 = vst [vmem:[#allocation2 + $0x48] sm:$0xff] 0.0
          %331 = vst [vmem:[#allocation2 + $0x50] sm:$0xff] 0.0
          %332 = vst [vmem:[#allocation2 + $0x58] sm:$0xff] 0.0
          %333 = vst [vmem:[#allocation2 + $0x60] sm:$0xff] 0.0
          %334 = vst [vmem:[#allocation2 + $0x68] sm:$0xff] 0.0
          %335 = vst [vmem:[#allocation2 + $0x70] sm:$0xff] 0.0
          %336 = vst [vmem:[#allocation2 + $0x78] sm:$0xff] 0.0
          %337 = vst [vmem:[#allocation2 + $0x80] sm:$0xff] 0.0
          %338 = vst [vmem:[#allocation2 + $0x88] sm:$0xff] 0.0
          %339 = vst [vmem:[#allocation2 + $0x90] sm:$0xff] 0.0
          %340 = vst [vmem:[#allocation2 + $0x98] sm:$0xff] 0.0
          %341 = vst [vmem:[#allocation2 + $0xa0] sm:$0xff] 0.0
          %342 = vst [vmem:[#allocation2 + $0xa8] sm:$0xff] 0.0
          %343 = vst [vmem:[#allocation2 + $0xb0] sm:$0xff] 0.0
          %344 = vst [vmem:[#allocation2 + $0xb8] sm:$0xff] 0.0
          %345 = vst [vmem:[#allocation2 + $0xc0] sm:$0xff] 0.0
          %346 = vst [vmem:[#allocation2 + $0xc8] sm:$0xff] 0.0
          %347 = vst [vmem:[#allocation2 + $0xd0] sm:$0xff] 0.0
          %348 = vst [vmem:[#allocation2 + $0xd8] sm:$0xff] 0.0
          %349 = vst [vmem:[#allocation2 + $0xe0] sm:$0xff] 0.0
          %350 = vst [vmem:[#allocation2 + $0xe8] sm:$0xff] 0.0
          %351 = vst [vmem:[#allocation2 + $0xf0] sm:$0xff] 0.0
          %352 = vst [vmem:[#allocation2 + $0xf8] sm:$0xff] 0.0
          %353 = vst [vmem:[#allocation2 + $0x100] sm:$0xff] 0.0
          %354 = vst [vmem:[#allocation2 + $0x108] sm:$0xff] 0.0
          %355 = vst [vmem:[#allocation2 + $0x110] sm:$0xff] 0.0
          %356 = vst [vmem:[#allocation2 + $0x118] sm:$0xff] 0.0
          %357 = vst [vmem:[#allocation2 + $0x120] sm:$0xff] 0.0
          %358 = vst [vmem:[#allocation2 + $0x128] sm:$0xff] 0.0
          %359 = vst [vmem:[#allocation2 + $0x130] sm:$0xff] 0.0
          %360 = vst [vmem:[#allocation2 + $0x138] sm:$0xff] 0.0
          %361 = vst [vmem:[#allocation2 + $0x140] sm:$0xff] 0.0
          %362 = vst [vmem:[#allocation2 + $0x148] sm:$0xff] 0.0
          %363 = vst [vmem:[#allocation2 + $0x150] sm:$0xff] 0.0
          %364 = vst [vmem:[#allocation2 + $0x158] sm:$0xff] 0.0
          %365 = vst [vmem:[#allocation2 + $0x160] sm:$0xff] 0.0
          %366 = vst [vmem:[#allocation2 + $0x168] sm:$0xff] 0.0
          %367 = vst [vmem:[#allocation2 + $0x170] sm:$0xff] 0.0
          %368 = vst [vmem:[#allocation2 + $0x178] sm:$0xff] 0.0
          %369 = vst [vmem:[#allocation2 + $0x180] sm:$0xff] 0.0
          %370 = vst [vmem:[#allocation2 + $0x188] sm:$0xff] 0.0
          %371 = vst [vmem:[#allocation2 + $0x190] sm:$0xff] 0.0
          %372 = vst [vmem:[#allocation2 + $0x198] sm:$0xff] 0.0
          %373 = vst [vmem:[#allocation2 + $0x1a0] sm:$0xff] 0.0
          %374 = vst [vmem:[#allocation2 + $0x1a8] sm:$0xff] 0.0
          %375 = vst [vmem:[#allocation2 + $0x1b0] sm:$0xff] 0.0
          %376 = vst [vmem:[#allocation2 + $0x1b8] sm:$0xff] 0.0
          %377 = vst [vmem:[#allocation2 + $0x1c0] sm:$0xff] 0.0
          %378 = vst [vmem:[#allocation2 + $0x1c8] sm:$0xff] 0.0
          %379 = vst [vmem:[#allocation2 + $0x1d0] sm:$0xff] 0.0
          %380 = vst [vmem:[#allocation2 + $0x1d8] sm:$0xff] 0.0
          %381 = vst [vmem:[#allocation2 + $0x1e0] sm:$0xff] 0.0
          %382 = vst [vmem:[#allocation2 + $0x1e8] sm:$0xff] 0.0
          %383 = vst [vmem:[#allocation2 + $0x1f0] sm:$0xff] 0.0
          %384 = vst [vmem:[#allocation2 + $0x1f8] sm:$0xff] 0.0
        $region56: #{tpu_custom_call.1} parent=35 // pred_fallthru
          _
        %v385 = vld [vmem:[#allocation2] sm:$0xff]
        %v386 = vld [vmem:[#allocation2 + $0x8] sm:$0xff]
        %v387 = vld [vmem:[#allocation2 + $0x10] sm:$0xff]
        %v388 = vld [vmem:[#allocation2 + $0x18] sm:$0xff]
        %v389 = vld [vmem:[#allocation2 + $0x20] sm:$0xff]
        %v390 = vld [vmem:[#allocation2 + $0x28] sm:$0xff]
        %v391 = vld [vmem:[#allocation2 + $0x30] sm:$0xff]
        %v392 = vld [vmem:[#allocation2 + $0x38] sm:$0xff]
        %v393 = vld [vmem:[#allocation2 + $0x40] sm:$0xff]
        %v394 = vld [vmem:[#allocation2 + $0x48] sm:$0xff]
        %v395 = vld [vmem:[#allocation2 + $0x50] sm:$0xff]
        %v396 = vld [vmem:[#allocation2 + $0x58] sm:$0xff]
        %v397 = vld [vmem:[#allocation2 + $0x60] sm:$0xff]
        %v398 = vld [vmem:[#allocation2 + $0x68] sm:$0xff]
        %v399 = vld [vmem:[#allocation2 + $0x70] sm:$0xff]
        %v400 = vld [vmem:[#allocation2 + $0x78] sm:$0xff]
        %v401 = vld [vmem:[#allocation2 + $0x80] sm:$0xff]
        %v402 = vld [vmem:[#allocation2 + $0x88] sm:$0xff]
        %v403 = vld [vmem:[#allocation2 + $0x90] sm:$0xff]
        %v404 = vld [vmem:[#allocation2 + $0x98] sm:$0xff]
        %v405 = vld [vmem:[#allocation2 + $0xa0] sm:$0xff]
        %v406 = vld [vmem:[#allocation2 + $0xa8] sm:$0xff]
        %v407 = vld [vmem:[#allocation2 + $0xb0] sm:$0xff]
        %v408 = vld [vmem:[#allocation2 + $0xb8] sm:$0xff]
        %v409 = vld [vmem:[#allocation2 + $0xc0] sm:$0xff]
        %v410 = vld [vmem:[#allocation2 + $0xc8] sm:$0xff]
        %v411 = vld [vmem:[#allocation2 + $0xd0] sm:$0xff]
        %v412 = vld [vmem:[#allocation2 + $0xd8] sm:$0xff]
        %v413 = vld [vmem:[#allocation2 + $0xe0] sm:$0xff]
        %v414 = vld [vmem:[#allocation2 + $0xe8] sm:$0xff]
        %v415 = vld [vmem:[#allocation2 + $0xf0] sm:$0xff]
        %v416 = vld [vmem:[#allocation2 + $0xf8] sm:$0xff]
        %v417 = vld [vmem:[#allocation2 + $0x100] sm:$0xff]
        %v418 = vld [vmem:[#allocation2 + $0x108] sm:$0xff]
        %v419 = vld [vmem:[#allocation2 + $0x110] sm:$0xff]
        %v420 = vld [vmem:[#allocation2 + $0x118] sm:$0xff]
        %v421 = vld [vmem:[#allocation2 + $0x120] sm:$0xff]
        %v422 = vld [vmem:[#allocation2 + $0x128] sm:$0xff]
        %v423 = vld [vmem:[#allocation2 + $0x130] sm:$0xff]
        %v424 = vld [vmem:[#allocation2 + $0x138] sm:$0xff]
        %v425 = vld [vmem:[#allocation2 + $0x140] sm:$0xff]
        %v426 = vld [vmem:[#allocation2 + $0x148] sm:$0xff]
        %v427 = vld [vmem:[#allocation2 + $0x150] sm:$0xff]
        %v428 = vld [vmem:[#allocation2 + $0x158] sm:$0xff]
        %v429 = vld [vmem:[#allocation2 + $0x160] sm:$0xff]
        %v430 = vld [vmem:[#allocation2 + $0x168] sm:$0xff]
        %v431 = vld [vmem:[#allocation2 + $0x170] sm:$0xff]
        %v432 = vld [vmem:[#allocation2 + $0x178] sm:$0xff]
        %v433 = vld [vmem:[#allocation2 + $0x180] sm:$0xff]
        %v434 = vld [vmem:[#allocation2 + $0x188] sm:$0xff]
        %v435 = vld [vmem:[#allocation2 + $0x190] sm:$0xff]
        %v436 = vld [vmem:[#allocation2 + $0x198] sm:$0xff]
        %v437 = vld [vmem:[#allocation2 + $0x1a0] sm:$0xff]
        %v438 = vld [vmem:[#allocation2 + $0x1a8] sm:$0xff]
        %v439 = vld [vmem:[#allocation2 + $0x1b0] sm:$0xff]
        %v440 = vld [vmem:[#allocation2 + $0x1b8] sm:$0xff]
        %v441 = vld [vmem:[#allocation2 + $0x1c0] sm:$0xff]
        %v442 = vld [vmem:[#allocation2 + $0x1c8] sm:$0xff]
        %v443 = vld [vmem:[#allocation2 + $0x1d0] sm:$0xff]
        %v444 = vld [vmem:[#allocation2 + $0x1d8] sm:$0xff]
        %v445 = vld [vmem:[#allocation2 + $0x1e0] sm:$0xff]
        %v446 = vld [vmem:[#allocation2 + $0x1e8] sm:$0xff]
        %v447 = vld [vmem:[#allocation2 + $0x1f0] sm:$0xff]
        %v448 = vld [vmem:[#allocation2 + $0x1f8] sm:$0xff]
        %v449 = vld [vmem:[%s272] sm:$0xff]
        %v450 = vld [vmem:[%s272 + $0x8] sm:$0xff]
        %v451 = vld [vmem:[%s272 + $0x10] sm:$0xff]
        %v452 = vld [vmem:[%s272 + $0x18] sm:$0xff]
        %v453 = vld [vmem:[%s272 + $0x20] sm:$0xff]
        %v454 = vld [vmem:[%s272 + $0x28] sm:$0xff]
        %v455 = vld [vmem:[%s272 + $0x30] sm:$0xff]
        %v456 = vld [vmem:[%s272 + $0x38] sm:$0xff]
        %v457 = vld [vmem:[%s272 + $0x40] sm:$0xff]
        %v458 = vld [vmem:[%s272 + $0x48] sm:$0xff]
        %v459 = vld [vmem:[%s272 + $0x50] sm:$0xff]
        %v460 = vld [vmem:[%s272 + $0x58] sm:$0xff]
        %v461 = vld [vmem:[%s272 + $0x60] sm:$0xff]
        %v462 = vld [vmem:[%s272 + $0x68] sm:$0xff]
        %v463 = vld [vmem:[%s272 + $0x70] sm:$0xff]
        %v464 = vld [vmem:[%s272 + $0x78] sm:$0xff]
        %v465 = vld [vmem:[%s272 + $0x80] sm:$0xff]
        %v466 = vld [vmem:[%s272 + $0x88] sm:$0xff]
        %v467 = vld [vmem:[%s272 + $0x90] sm:$0xff]
        %v468 = vld [vmem:[%s272 + $0x98] sm:$0xff]
        %v469 = vld [vmem:[%s272 + $0xa0] sm:$0xff]
        %v470 = vld [vmem:[%s272 + $0xa8] sm:$0xff]
        %v471 = vld [vmem:[%s272 + $0xb0] sm:$0xff]
        %v472 = vld [vmem:[%s272 + $0xb8] sm:$0xff]
        %v473 = vld [vmem:[%s272 + $0xc0] sm:$0xff]
        %v474 = vld [vmem:[%s272 + $0xc8] sm:$0xff]
        %v475 = vld [vmem:[%s272 + $0xd0] sm:$0xff]
        %v476 = vld [vmem:[%s272 + $0xd8] sm:$0xff]
        %v477 = vld [vmem:[%s272 + $0xe0] sm:$0xff]
        %v478 = vld [vmem:[%s272 + $0xe8] sm:$0xff]
        %v479 = vld [vmem:[%s272 + $0xf0] sm:$0xff]
        %v480 = vld [vmem:[%s272 + $0xf8] sm:$0xff]
        %v481 = vld [vmem:[%s272 + $0x100] sm:$0xff]
        %v482 = vld [vmem:[%s272 + $0x108] sm:$0xff]
        %v483 = vld [vmem:[%s272 + $0x110] sm:$0xff]
        %v484 = vld [vmem:[%s272 + $0x118] sm:$0xff]
        %v485 = vld [vmem:[%s272 + $0x120] sm:$0xff]
        %v486 = vld [vmem:[%s272 + $0x128] sm:$0xff]
        %v487 = vld [vmem:[%s272 + $0x130] sm:$0xff]
        %v488 = vld [vmem:[%s272 + $0x138] sm:$0xff]
        %v489 = vld [vmem:[%s272 + $0x140] sm:$0xff]
        %v490 = vld [vmem:[%s272 + $0x148] sm:$0xff]
        %v491 = vld [vmem:[%s272 + $0x150] sm:$0xff]
        %v492 = vld [vmem:[%s272 + $0x158] sm:$0xff]
        %v493 = vld [vmem:[%s272 + $0x160] sm:$0xff]
        %v494 = vld [vmem:[%s272 + $0x168] sm:$0xff]
        %v495 = vld [vmem:[%s272 + $0x170] sm:$0xff]
        %v496 = vld [vmem:[%s272 + $0x178] sm:$0xff]
        %v497 = vld [vmem:[%s272 + $0x180] sm:$0xff]
        %v498 = vld [vmem:[%s272 + $0x188] sm:$0xff]
        %v499 = vld [vmem:[%s272 + $0x190] sm:$0xff]
        %v500 = vld [vmem:[%s272 + $0x198] sm:$0xff]
        %v501 = vld [vmem:[%s272 + $0x1a0] sm:$0xff]
        %v502 = vld [vmem:[%s272 + $0x1a8] sm:$0xff]
        %v503 = vld [vmem:[%s272 + $0x1b0] sm:$0xff]
        %v504 = vld [vmem:[%s272 + $0x1b8] sm:$0xff]
        %v505 = vld [vmem:[%s272 + $0x1c0] sm:$0xff]
        %v506 = vld [vmem:[%s272 + $0x1c8] sm:$0xff]
        %v507 = vld [vmem:[%s272 + $0x1d0] sm:$0xff]
        %v508 = vld [vmem:[%s272 + $0x1d8] sm:$0xff]
        %v509 = vld [vmem:[%s272 + $0x1e0] sm:$0xff]
        %v510 = vld [vmem:[%s272 + $0x1e8] sm:$0xff]
        %v511 = vld [vmem:[%s272 + $0x1f0] sm:$0xff]
        %v512 = vld [vmem:[%s272 + $0x1f8] sm:$0xff]
        %v513 = vld [vmem:[#allocation6] sm:$0xf]
        %v514 = vld [vmem:[#allocation6 + $0x4] sm:$0xf]
        %v515 = vld [vmem:[#allocation6 + $0x8] sm:$0xf]
        %v516 = vld [vmem:[#allocation6 + $0xc] sm:$0xf]
        %v517 = vld [vmem:[#allocation6 + $0x10] sm:$0xf]
        %v518 = vld [vmem:[#allocation6 + $0x14] sm:$0xf]
        %v519 = vld [vmem:[#allocation6 + $0x18] sm:$0xf]
        %v520 = vld [vmem:[#allocation6 + $0x1c] sm:$0xf]
        %v521 = vld [vmem:[#allocation6 + $0x20] sm:$0xf]
        %v522 = vld [vmem:[#allocation6 + $0x24] sm:$0xf]
        %v523 = vld [vmem:[#allocation6 + $0x28] sm:$0xf]
        %v524 = vld [vmem:[#allocation6 + $0x2c] sm:$0xf]
        %v525 = vld [vmem:[#allocation6 + $0x30] sm:$0xf]
        %v526 = vld [vmem:[#allocation6 + $0x34] sm:$0xf]
        %v527 = vld [vmem:[#allocation6 + $0x38] sm:$0xf]
        %v528 = vld [vmem:[#allocation6 + $0x3c] sm:$0xf]
        %v529 = vld [vmem:[#allocation6 + $0x40] sm:$0xf]
        %v530 = vld [vmem:[#allocation6 + $0x44] sm:$0xf]
        %v531 = vld [vmem:[#allocation6 + $0x48] sm:$0xf]
        %v532 = vld [vmem:[#allocation6 + $0x4c] sm:$0xf]
        %v533 = vld [vmem:[#allocation6 + $0x50] sm:$0xf]
        %v534 = vld [vmem:[#allocation6 + $0x54] sm:$0xf]
        %v535 = vld [vmem:[#allocation6 + $0x58] sm:$0xf]
        %v536 = vld [vmem:[#allocation6 + $0x5c] sm:$0xf]
        %v537 = vld [vmem:[#allocation6 + $0x60] sm:$0xf]
        %v538 = vld [vmem:[#allocation6 + $0x64] sm:$0xf]
        %v539 = vld [vmem:[#allocation6 + $0x68] sm:$0xf]
        %v540 = vld [vmem:[#allocation6 + $0x6c] sm:$0xf]
        %v541 = vld [vmem:[#allocation6 + $0x70] sm:$0xf]
        %v542 = vld [vmem:[#allocation6 + $0x74] sm:$0xf]
        %v543 = vld [vmem:[#allocation6 + $0x78] sm:$0xf]
        %v544 = vld [vmem:[#allocation6 + $0x7c] sm:$0xf]
        %v609 = vunpack.c.l.b16 %v449
        %v610 = vunpack.c.h.b16 %v449
        %v611 = vunpack.c.l.b16 %v450
        %v612 = vunpack.c.h.b16 %v450
        %v613 = vunpack.c.l.b16 %v451
        %v614 = vunpack.c.h.b16 %v451
        %v615 = vunpack.c.l.b16 %v452
        %v616 = vunpack.c.h.b16 %v452
        %v617 = vunpack.c.l.b16 %v453
        %v618 = vunpack.c.h.b16 %v453
        %v619 = vunpack.c.l.b16 %v454
        %v620 = vunpack.c.h.b16 %v454
        %v621 = vunpack.c.l.b16 %v455
        %v622 = vunpack.c.h.b16 %v455
        %v623 = vunpack.c.l.b16 %v456
        %v624 = vunpack.c.h.b16 %v456
        %v625 = vunpack.c.l.b16 %v457
        %v626 = vunpack.c.h.b16 %v457
        %v627 = vunpack.c.l.b16 %v458
        %v628 = vunpack.c.h.b16 %v458
        %v629 = vunpack.c.l.b16 %v459
        %v630 = vunpack.c.h.b16 %v459
        %v631 = vunpack.c.l.b16 %v460
        %v632 = vunpack.c.h.b16 %v460
        %v633 = vunpack.c.l.b16 %v461
        %v634 = vunpack.c.h.b16 %v461
        %v635 = vunpack.c.l.b16 %v462
        %v636 = vunpack.c.h.b16 %v462
        %v637 = vunpack.c.l.b16 %v463
        %v638 = vunpack.c.h.b16 %v463
        %v639 = vunpack.c.l.b16 %v464
        %v640 = vunpack.c.h.b16 %v464
        %v641 = vunpack.c.l.b16 %v465
        %v642 = vunpack.c.h.b16 %v465
        %v643 = vunpack.c.l.b16 %v466
        %v644 = vunpack.c.h.b16 %v466
        %v645 = vunpack.c.l.b16 %v467
        %v646 = vunpack.c.h.b16 %v467
        %v647 = vunpack.c.l.b16 %v468
        %v648 = vunpack.c.h.b16 %v468
        %v649 = vunpack.c.l.b16 %v469
        %v650 = vunpack.c.h.b16 %v469
        %v651 = vunpack.c.l.b16 %v470
        %v652 = vunpack.c.h.b16 %v470
        %v653 = vunpack.c.l.b16 %v471
        %v654 = vunpack.c.h.b16 %v471
        %v655 = vunpack.c.l.b16 %v472
        %v656 = vunpack.c.h.b16 %v472
        %v657 = vunpack.c.l.b16 %v473
        %v658 = vunpack.c.h.b16 %v473
        %v659 = vunpack.c.l.b16 %v474
        %v660 = vunpack.c.h.b16 %v474
        %v661 = vunpack.c.l.b16 %v475
        %v662 = vunpack.c.h.b16 %v475
        %v663 = vunpack.c.l.b16 %v476
        %v664 = vunpack.c.h.b16 %v476
        %v665 = vunpack.c.l.b16 %v477
        %v666 = vunpack.c.h.b16 %v477
        %v667 = vunpack.c.l.b16 %v478
        %v668 = vunpack.c.h.b16 %v478
        %v669 = vunpack.c.l.b16 %v479
        %v670 = vunpack.c.h.b16 %v479
        %v671 = vunpack.c.l.b16 %v480
        %v672 = vunpack.c.h.b16 %v480
        %v673 = vunpack.c.l.b16 %v481
        %v674 = vunpack.c.h.b16 %v481
        %v675 = vunpack.c.l.b16 %v482
        %v676 = vunpack.c.h.b16 %v482
        %v677 = vunpack.c.l.b16 %v483
        %v678 = vunpack.c.h.b16 %v483
        %v679 = vunpack.c.l.b16 %v484
        %v680 = vunpack.c.h.b16 %v484
        %v681 = vunpack.c.l.b16 %v485
        %v682 = vunpack.c.h.b16 %v485
        %v683 = vunpack.c.l.b16 %v486
        %v684 = vunpack.c.h.b16 %v486
        %v685 = vunpack.c.l.b16 %v487
        %v686 = vunpack.c.h.b16 %v487
        %v687 = vunpack.c.l.b16 %v488
        %v688 = vunpack.c.h.b16 %v488
        %v689 = vunpack.c.l.b16 %v489
        %v690 = vunpack.c.h.b16 %v489
        %v691 = vunpack.c.l.b16 %v490
        %v692 = vunpack.c.h.b16 %v490
        %v693 = vunpack.c.l.b16 %v491
        %v694 = vunpack.c.h.b16 %v491
        %v695 = vunpack.c.l.b16 %v492
        %v696 = vunpack.c.h.b16 %v492
        %v697 = vunpack.c.l.b16 %v493
        %v698 = vunpack.c.h.b16 %v493
        %v699 = vunpack.c.l.b16 %v494
        %v700 = vunpack.c.h.b16 %v494
        %v701 = vunpack.c.l.b16 %v495
        %v702 = vunpack.c.h.b16 %v495
        %v703 = vunpack.c.l.b16 %v496
        %v704 = vunpack.c.h.b16 %v496
        %v705 = vunpack.c.l.b16 %v497
        %v706 = vunpack.c.h.b16 %v497
        %v707 = vunpack.c.l.b16 %v498
        %v708 = vunpack.c.h.b16 %v498
        %v709 = vunpack.c.l.b16 %v499
        %v710 = vunpack.c.h.b16 %v499
        %v711 = vunpack.c.l.b16 %v500
        %v712 = vunpack.c.h.b16 %v500
        %v713 = vunpack.c.l.b16 %v501
        %v714 = vunpack.c.h.b16 %v501
        %v715 = vunpack.c.l.b16 %v502
        %v716 = vunpack.c.h.b16 %v502
        %v717 = vunpack.c.l.b16 %v503
        %v718 = vunpack.c.h.b16 %v503
        %v719 = vunpack.c.l.b16 %v504
        %v720 = vunpack.c.h.b16 %v504
        %v721 = vunpack.c.l.b16 %v505
        %v722 = vunpack.c.h.b16 %v505
        %v723 = vunpack.c.l.b16 %v506
        %v724 = vunpack.c.h.b16 %v506
        %v725 = vunpack.c.l.b16 %v507
        %v726 = vunpack.c.h.b16 %v507
        %v727 = vunpack.c.l.b16 %v508
        %v728 = vunpack.c.h.b16 %v508
        %v729 = vunpack.c.l.b16 %v509
        %v730 = vunpack.c.h.b16 %v509
        %v731 = vunpack.c.l.b16 %v510
        %v732 = vunpack.c.h.b16 %v510
        %v733 = vunpack.c.l.b16 %v511
        %v734 = vunpack.c.h.b16 %v511
        %v735 = vunpack.c.l.b16 %v512
        %v736 = vunpack.c.h.b16 %v512
        %v737 = vpack.c.b16 %v611, %v609
        %v738 = vpack.c.b16 %v612, %v610
        %v739 = vpack.c.b16 %v615, %v613
        %v740 = vpack.c.b16 %v616, %v614
        %v741 = vpack.c.b16 %v619, %v617
        %v742 = vpack.c.b16 %v620, %v618
        %v743 = vpack.c.b16 %v623, %v621
        %v744 = vpack.c.b16 %v624, %v622
        %v745 = vpack.c.b16 %v627, %v625
        %v746 = vpack.c.b16 %v628, %v626
        %v747 = vpack.c.b16 %v631, %v629
        %v748 = vpack.c.b16 %v632, %v630
        %v749 = vpack.c.b16 %v635, %v633
        %v750 = vpack.c.b16 %v636, %v634
        %v751 = vpack.c.b16 %v639, %v637
        %v752 = vpack.c.b16 %v640, %v638
        %v753 = vpack.c.b16 %v643, %v641
        %v754 = vpack.c.b16 %v644, %v642
        %v755 = vpack.c.b16 %v647, %v645
        %v756 = vpack.c.b16 %v648, %v646
        %v757 = vpack.c.b16 %v651, %v649
        %v758 = vpack.c.b16 %v652, %v650
        %v759 = vpack.c.b16 %v655, %v653
        %v760 = vpack.c.b16 %v656, %v654
        %v761 = vpack.c.b16 %v659, %v657
        %v762 = vpack.c.b16 %v660, %v658
        %v763 = vpack.c.b16 %v663, %v661
        %v764 = vpack.c.b16 %v664, %v662
        %v765 = vpack.c.b16 %v667, %v665
        %v766 = vpack.c.b16 %v668, %v666
        %v767 = vpack.c.b16 %v671, %v669
        %v768 = vpack.c.b16 %v672, %v670
        %v769 = vpack.c.b16 %v675, %v673
        %v770 = vpack.c.b16 %v676, %v674
        %v771 = vpack.c.b16 %v679, %v677
        %v772 = vpack.c.b16 %v680, %v678
        %v773 = vpack.c.b16 %v683, %v681
        %v774 = vpack.c.b16 %v684, %v682
        %v775 = vpack.c.b16 %v687, %v685
        %v776 = vpack.c.b16 %v688, %v686
        %v777 = vpack.c.b16 %v691, %v689
        %v778 = vpack.c.b16 %v692, %v690
        %v779 = vpack.c.b16 %v695, %v693
        %v780 = vpack.c.b16 %v696, %v694
        %v781 = vpack.c.b16 %v699, %v697
        %v782 = vpack.c.b16 %v700, %v698
        %v783 = vpack.c.b16 %v703, %v701
        %v784 = vpack.c.b16 %v704, %v702
        %v785 = vpack.c.b16 %v707, %v705
        %v786 = vpack.c.b16 %v708, %v706
        %v787 = vpack.c.b16 %v711, %v709
        %v788 = vpack.c.b16 %v712, %v710
        %v789 = vpack.c.b16 %v715, %v713
        %v790 = vpack.c.b16 %v716, %v714
        %v791 = vpack.c.b16 %v719, %v717
        %v792 = vpack.c.b16 %v720, %v718
        %v793 = vpack.c.b16 %v723, %v721
        %v794 = vpack.c.b16 %v724, %v722
        %v795 = vpack.c.b16 %v727, %v725
        %v796 = vpack.c.b16 %v728, %v726
        %v797 = vpack.c.b16 %v731, %v729
        %v798 = vpack.c.b16 %v732, %v730
        %v799 = vpack.c.b16 %v735, %v733
        %v800 = vpack.c.b16 %v736, %v734
        %v897 = vunpack.c.l.b16 %v513
        %v898 = vunpack.c.l.b16 %v514
        %v899 = vunpack.c.l.b16 %v515
        %v900 = vunpack.c.l.b16 %v516
        %v901 = vunpack.c.l.b16 %v517
        %v902 = vunpack.c.l.b16 %v518
        %v903 = vunpack.c.l.b16 %v519
        %v904 = vunpack.c.l.b16 %v520
        %v905 = vunpack.c.l.b16 %v521
        %v906 = vunpack.c.l.b16 %v522
        %v907 = vunpack.c.l.b16 %v523
        %v908 = vunpack.c.l.b16 %v524
        %v909 = vunpack.c.l.b16 %v525
        %v910 = vunpack.c.l.b16 %v526
        %v911 = vunpack.c.l.b16 %v527
        %v912 = vunpack.c.l.b16 %v528
        %v913 = vunpack.c.l.b16 %v529
        %v914 = vunpack.c.l.b16 %v530
        %v915 = vunpack.c.l.b16 %v531
        %v916 = vunpack.c.l.b16 %v532
        %v917 = vunpack.c.l.b16 %v533
        %v918 = vunpack.c.l.b16 %v534
        %v919 = vunpack.c.l.b16 %v535
        %v920 = vunpack.c.l.b16 %v536
        %v921 = vunpack.c.l.b16 %v537
        %v922 = vunpack.c.l.b16 %v538
        %v923 = vunpack.c.l.b16 %v539
        %v924 = vunpack.c.l.b16 %v540
        %v925 = vunpack.c.l.b16 %v541
        %v926 = vunpack.c.l.b16 %v542
        %v927 = vunpack.c.l.b16 %v543
        %v928 = vunpack.c.l.b16 %v544
        %v929 = vpack.c.b16 %v898, %v897
        %v930 = vpack.c.b16 %v900, %v899
        %v931 = vpack.c.b16 %v902, %v901
        %v932 = vpack.c.b16 %v904, %v903
        %v933 = vpack.c.b16 %v906, %v905
        %v934 = vpack.c.b16 %v908, %v907
        %v935 = vpack.c.b16 %v910, %v909
        %v936 = vpack.c.b16 %v912, %v911
        %v937 = vpack.c.b16 %v914, %v913
        %v938 = vpack.c.b16 %v916, %v915
        %v939 = vpack.c.b16 %v918, %v917
        %v940 = vpack.c.b16 %v920, %v919
        %v941 = vpack.c.b16 %v922, %v921
        %v942 = vpack.c.b16 %v924, %v923
        %v943 = vpack.c.b16 %v926, %v925
        %v944 = vpack.c.b16 %v928, %v927
        %961 = vmatpush.bf16.msra.mxu0 %v936
        %962 = vmatpush.bf16.msra.mxu0 %v935
        %963 = vmatpush.bf16.msra.mxu0 %v934
        %964 = vmatpush.bf16.msra.mxu0 %v933
        %965 = vmatpush.bf16.msra.mxu0 %v932
        %966 = vmatpush.bf16.msra.mxu0 %v931
        %967 = vmatpush.bf16.msra.mxu0 %v930
        %968 = vmatpush.bf16.msra.mxu0 %v929
        %969 = vmatmul.bf16.gmra.mxu0 %v737
        %v970 = vpop.f32.mrf.mxu0
        %v971 = vadd.f32 0.0, %v970
        %v972 = vpop.f32.mrf.mxu0
        %v973 = vadd.f32 0.0, %v972
        %974 = vmatmul.bf16.gmra.mxu0 %v739
        %v975 = vpop.f32.mrf.mxu0
        %v976 = vadd.f32 0.0, %v975
        %v977 = vpop.f32.mrf.mxu0
        %v978 = vadd.f32 0.0, %v977
        %979 = vmatmul.bf16.gmra.mxu0 %v741
        %v980 = vpop.f32.mrf.mxu0
        %v981 = vadd.f32 0.0, %v980
        %v982 = vpop.f32.mrf.mxu0
        %v983 = vadd.f32 0.0, %v982
        %984 = vmatmul.bf16.gmra.mxu0 %v743
        %v985 = vpop.f32.mrf.mxu0
        %v986 = vadd.f32 0.0, %v985
        %v987 = vpop.f32.mrf.mxu0
        %v988 = vadd.f32 0.0, %v987
        %989 = vmatmul.bf16.gmra.mxu0 %v745
        %v990 = vpop.f32.mrf.mxu0
        %v991 = vadd.f32 0.0, %v990
        %v992 = vpop.f32.mrf.mxu0
        %v993 = vadd.f32 0.0, %v992
        %994 = vmatmul.bf16.gmra.mxu0 %v747
        %v995 = vpop.f32.mrf.mxu0
        %v996 = vadd.f32 0.0, %v995
        %v997 = vpop.f32.mrf.mxu0
        %v998 = vadd.f32 0.0, %v997
        %999 = vmatmul.bf16.gmra.mxu0 %v749
        %v1000 = vpop.f32.mrf.mxu0
        %v1001 = vadd.f32 0.0, %v1000
        %v1002 = vpop.f32.mrf.mxu0
        %v1003 = vadd.f32 0.0, %v1002
        %1004 = vmatmul.bf16.gmra.mxu0 %v751
        %v1005 = vpop.f32.mrf.mxu0
        %v1006 = vadd.f32 0.0, %v1005
        %v1007 = vpop.f32.mrf.mxu0
        %v1008 = vadd.f32 0.0, %v1007
        %1009 = vmatmul.bf16.gmra.mxu0 %v753
        %v1010 = vpop.f32.mrf.mxu0
        %v1011 = vadd.f32 0.0, %v1010
        %v1012 = vpop.f32.mrf.mxu0
        %v1013 = vadd.f32 0.0, %v1012
        %1014 = vmatmul.bf16.gmra.mxu0 %v755
        %v1015 = vpop.f32.mrf.mxu0
        %v1016 = vadd.f32 0.0, %v1015
        %v1017 = vpop.f32.mrf.mxu0
        %v1018 = vadd.f32 0.0, %v1017
        %1019 = vmatmul.bf16.gmra.mxu0 %v757
        %v1020 = vpop.f32.mrf.mxu0
        %v1021 = vadd.f32 0.0, %v1020
        %v1022 = vpop.f32.mrf.mxu0
        %v1023 = vadd.f32 0.0, %v1022
        %1024 = vmatmul.bf16.gmra.mxu0 %v759
        %v1025 = vpop.f32.mrf.mxu0
        %v1026 = vadd.f32 0.0, %v1025
        %v1027 = vpop.f32.mrf.mxu0
        %v1028 = vadd.f32 0.0, %v1027
        %1029 = vmatmul.bf16.gmra.mxu0 %v761
        %v1030 = vpop.f32.mrf.mxu0
        %v1031 = vadd.f32 0.0, %v1030
        %v1032 = vpop.f32.mrf.mxu0
        %v1033 = vadd.f32 0.0, %v1032
        %1034 = vmatmul.bf16.gmra.mxu0 %v763
        %v1035 = vpop.f32.mrf.mxu0
        %v1036 = vadd.f32 0.0, %v1035
        %v1037 = vpop.f32.mrf.mxu0
        %v1038 = vadd.f32 0.0, %v1037
        %1039 = vmatmul.bf16.gmra.mxu0 %v765
        %v1040 = vpop.f32.mrf.mxu0
        %v1041 = vadd.f32 0.0, %v1040
        %v1042 = vpop.f32.mrf.mxu0
        %v1043 = vadd.f32 0.0, %v1042
        %1044 = vmatmul.bf16.gmra.mxu0 %v767
        %v1045 = vpop.f32.mrf.mxu0
        %v1046 = vadd.f32 0.0, %v1045
        %v1047 = vpop.f32.mrf.mxu0
        %v1048 = vadd.f32 0.0, %v1047
        %1049 = vmatmul.bf16.gmra.mxu0 %v769
        %v1050 = vpop.f32.mrf.mxu0
        %v1051 = vadd.f32 0.0, %v1050
        %v1052 = vpop.f32.mrf.mxu0
        %v1053 = vadd.f32 0.0, %v1052
        %1054 = vmatmul.bf16.gmra.mxu0 %v771
        %v1055 = vpop.f32.mrf.mxu0
        %v1056 = vadd.f32 0.0, %v1055
        %v1057 = vpop.f32.mrf.mxu0
        %v1058 = vadd.f32 0.0, %v1057
        %1059 = vmatmul.bf16.gmra.mxu0 %v773
        %v1060 = vpop.f32.mrf.mxu0
        %v1061 = vadd.f32 0.0, %v1060
        %v1062 = vpop.f32.mrf.mxu0
        %v1063 = vadd.f32 0.0, %v1062
        %1064 = vmatmul.bf16.gmra.mxu0 %v775
        %v1065 = vpop.f32.mrf.mxu0
        %v1066 = vadd.f32 0.0, %v1065
        %v1067 = vpop.f32.mrf.mxu0
        %v1068 = vadd.f32 0.0, %v1067
        %1069 = vmatmul.bf16.gmra.mxu0 %v777
        %v1070 = vpop.f32.mrf.mxu0
        %v1071 = vadd.f32 0.0, %v1070
        %v1072 = vpop.f32.mrf.mxu0
        %v1073 = vadd.f32 0.0, %v1072
        %1074 = vmatmul.bf16.gmra.mxu0 %v779
        %v1075 = vpop.f32.mrf.mxu0
        %v1076 = vadd.f32 0.0, %v1075
        %v1077 = vpop.f32.mrf.mxu0
        %v1078 = vadd.f32 0.0, %v1077
        %1079 = vmatmul.bf16.gmra.mxu0 %v781
        %v1080 = vpop.f32.mrf.mxu0
        %v1081 = vadd.f32 0.0, %v1080
        %v1082 = vpop.f32.mrf.mxu0
        %v1083 = vadd.f32 0.0, %v1082
        %1084 = vmatmul.bf16.gmra.mxu0 %v783
        %v1085 = vpop.f32.mrf.mxu0
        %v1086 = vadd.f32 0.0, %v1085
        %v1087 = vpop.f32.mrf.mxu0
        %v1088 = vadd.f32 0.0, %v1087
        %1089 = vmatmul.bf16.gmra.mxu0 %v785
        %v1090 = vpop.f32.mrf.mxu0
        %v1091 = vadd.f32 0.0, %v1090
        %v1092 = vpop.f32.mrf.mxu0
        %v1093 = vadd.f32 0.0, %v1092
        %1094 = vmatmul.bf16.gmra.mxu0 %v787
        %v1095 = vpop.f32.mrf.mxu0
        %v1096 = vadd.f32 0.0, %v1095
        %v1097 = vpop.f32.mrf.mxu0
        %v1098 = vadd.f32 0.0, %v1097
        %1099 = vmatmul.bf16.gmra.mxu0 %v789
        %v1100 = vpop.f32.mrf.mxu0
        %v1101 = vadd.f32 0.0, %v1100
        %v1102 = vpop.f32.mrf.mxu0
        %v1103 = vadd.f32 0.0, %v1102
        %1104 = vmatmul.bf16.gmra.mxu0 %v791
        %v1105 = vpop.f32.mrf.mxu0
        %v1106 = vadd.f32 0.0, %v1105
        %v1107 = vpop.f32.mrf.mxu0
        %v1108 = vadd.f32 0.0, %v1107
        %1109 = vmatmul.bf16.gmra.mxu0 %v793
        %v1110 = vpop.f32.mrf.mxu0
        %v1111 = vadd.f32 0.0, %v1110
        %v1112 = vpop.f32.mrf.mxu0
        %v1113 = vadd.f32 0.0, %v1112
        %1114 = vmatmul.bf16.gmra.mxu0 %v795
        %v1115 = vpop.f32.mrf.mxu0
        %v1116 = vadd.f32 0.0, %v1115
        %v1117 = vpop.f32.mrf.mxu0
        %v1118 = vadd.f32 0.0, %v1117
        %1119 = vmatmul.bf16.gmra.mxu0 %v797
        %v1120 = vpop.f32.mrf.mxu0
        %v1121 = vadd.f32 0.0, %v1120
        %v1122 = vpop.f32.mrf.mxu0
        %v1123 = vadd.f32 0.0, %v1122
        %1124 = vmatmul.bf16.gmra.mxu0 %v799
        %v1125 = vpop.f32.mrf.mxu0
        %v1126 = vadd.f32 0.0, %v1125
        %v1127 = vpop.f32.mrf.mxu0
        %v1128 = vadd.f32 0.0, %v1127
        %1129 = vdwg.mxu0
        %1130 = vmatpush.bf16.msra.mxu0 %v944
        %1131 = vmatpush.bf16.msra.mxu0 %v943
        %1132 = vmatpush.bf16.msra.mxu0 %v942
        %1133 = vmatpush.bf16.msra.mxu0 %v941
        %1134 = vmatpush.bf16.msra.mxu0 %v940
        %1135 = vmatpush.bf16.msra.mxu0 %v939
        %1136 = vmatpush.bf16.msra.mxu0 %v938
        %1137 = vmatpush.bf16.msra.mxu0 %v937
        %1138 = vmatmul.bf16.gmra.mxu0 %v738
        %v1139 = vpop.f32.mrf.mxu0
        %v1140 = vadd.f32 %v971, %v1139
        %v1141 = vpop.f32.mrf.mxu0
        %v1142 = vadd.f32 %v973, %v1141
        %1143 = vmatmul.bf16.gmra.mxu0 %v740
        %v1144 = vpop.f32.mrf.mxu0
        %v1145 = vadd.f32 %v976, %v1144
        %v1146 = vpop.f32.mrf.mxu0
        %v1147 = vadd.f32 %v978, %v1146
        %1148 = vmatmul.bf16.gmra.mxu0 %v742
        %v1149 = vpop.f32.mrf.mxu0
        %v1150 = vadd.f32 %v981, %v1149
        %v1151 = vpop.f32.mrf.mxu0
        %v1152 = vadd.f32 %v983, %v1151
        %1153 = vmatmul.bf16.gmra.mxu0 %v744
        %v1154 = vpop.f32.mrf.mxu0
        %v1155 = vadd.f32 %v986, %v1154
        %v1156 = vpop.f32.mrf.mxu0
        %v1157 = vadd.f32 %v988, %v1156
        %1158 = vmatmul.bf16.gmra.mxu0 %v746
        %v1159 = vpop.f32.mrf.mxu0
        %v1160 = vadd.f32 %v991, %v1159
        %v1161 = vpop.f32.mrf.mxu0
        %v1162 = vadd.f32 %v993, %v1161
        %1163 = vmatmul.bf16.gmra.mxu0 %v748
        %v1164 = vpop.f32.mrf.mxu0
        %v1165 = vadd.f32 %v996, %v1164
        %v1166 = vpop.f32.mrf.mxu0
        %v1167 = vadd.f32 %v998, %v1166
        %1168 = vmatmul.bf16.gmra.mxu0 %v750
        %v1169 = vpop.f32.mrf.mxu0
        %v1170 = vadd.f32 %v1001, %v1169
        %v1171 = vpop.f32.mrf.mxu0
        %v1172 = vadd.f32 %v1003, %v1171
        %1173 = vmatmul.bf16.gmra.mxu0 %v752
        %v1174 = vpop.f32.mrf.mxu0
        %v1175 = vadd.f32 %v1006, %v1174
        %v1176 = vpop.f32.mrf.mxu0
        %v1177 = vadd.f32 %v1008, %v1176
        %1178 = vmatmul.bf16.gmra.mxu0 %v754
        %v1179 = vpop.f32.mrf.mxu0
        %v1180 = vadd.f32 %v1011, %v1179
        %v1181 = vpop.f32.mrf.mxu0
        %v1182 = vadd.f32 %v1013, %v1181
        %1183 = vmatmul.bf16.gmra.mxu0 %v756
        %v1184 = vpop.f32.mrf.mxu0
        %v1185 = vadd.f32 %v1016, %v1184
        %v1186 = vpop.f32.mrf.mxu0
        %v1187 = vadd.f32 %v1018, %v1186
        %1188 = vmatmul.bf16.gmra.mxu0 %v758
        %v1189 = vpop.f32.mrf.mxu0
        %v1190 = vadd.f32 %v1021, %v1189
        %v1191 = vpop.f32.mrf.mxu0
        %v1192 = vadd.f32 %v1023, %v1191
        %1193 = vmatmul.bf16.gmra.mxu0 %v760
        %v1194 = vpop.f32.mrf.mxu0
        %v1195 = vadd.f32 %v1026, %v1194
        %v1196 = vpop.f32.mrf.mxu0
        %v1197 = vadd.f32 %v1028, %v1196
        %1198 = vmatmul.bf16.gmra.mxu0 %v762
        %v1199 = vpop.f32.mrf.mxu0
        %v1200 = vadd.f32 %v1031, %v1199
        %v1201 = vpop.f32.mrf.mxu0
        %v1202 = vadd.f32 %v1033, %v1201
        %1203 = vmatmul.bf16.gmra.mxu0 %v764
        %v1204 = vpop.f32.mrf.mxu0
        %v1205 = vadd.f32 %v1036, %v1204
        %v1206 = vpop.f32.mrf.mxu0
        %v1207 = vadd.f32 %v1038, %v1206
        %1208 = vmatmul.bf16.gmra.mxu0 %v766
        %v1209 = vpop.f32.mrf.mxu0
        %v1210 = vadd.f32 %v1041, %v1209
        %v1211 = vpop.f32.mrf.mxu0
        %v1212 = vadd.f32 %v1043, %v1211
        %1213 = vmatmul.bf16.gmra.mxu0 %v768
        %v1214 = vpop.f32.mrf.mxu0
        %v1215 = vadd.f32 %v1046, %v1214
        %v1216 = vpop.f32.mrf.mxu0
        %v1217 = vadd.f32 %v1048, %v1216
        %1218 = vmatmul.bf16.gmra.mxu0 %v770
        %v1219 = vpop.f32.mrf.mxu0
        %v1220 = vadd.f32 %v1051, %v1219
        %v1221 = vpop.f32.mrf.mxu0
        %v1222 = vadd.f32 %v1053, %v1221
        %1223 = vmatmul.bf16.gmra.mxu0 %v772
        %v1224 = vpop.f32.mrf.mxu0
        %v1225 = vadd.f32 %v1056, %v1224
        %v1226 = vpop.f32.mrf.mxu0
        %v1227 = vadd.f32 %v1058, %v1226
        %1228 = vmatmul.bf16.gmra.mxu0 %v774
        %v1229 = vpop.f32.mrf.mxu0
        %v1230 = vadd.f32 %v1061, %v1229
        %v1231 = vpop.f32.mrf.mxu0
        %v1232 = vadd.f32 %v1063, %v1231
        %1233 = vmatmul.bf16.gmra.mxu0 %v776
        %v1234 = vpop.f32.mrf.mxu0
        %v1235 = vadd.f32 %v1066, %v1234
        %v1236 = vpop.f32.mrf.mxu0
        %v1237 = vadd.f32 %v1068, %v1236
        %1238 = vmatmul.bf16.gmra.mxu0 %v778
        %v1239 = vpop.f32.mrf.mxu0
        %v1240 = vadd.f32 %v1071, %v1239
        %v1241 = vpop.f32.mrf.mxu0
        %v1242 = vadd.f32 %v1073, %v1241
        %1243 = vmatmul.bf16.gmra.mxu0 %v780
        %v1244 = vpop.f32.mrf.mxu0
        %v1245 = vadd.f32 %v1076, %v1244
        %v1246 = vpop.f32.mrf.mxu0
        %v1247 = vadd.f32 %v1078, %v1246
        %1248 = vmatmul.bf16.gmra.mxu0 %v782
        %v1249 = vpop.f32.mrf.mxu0
        %v1250 = vadd.f32 %v1081, %v1249
        %v1251 = vpop.f32.mrf.mxu0
        %v1252 = vadd.f32 %v1083, %v1251
        %1253 = vmatmul.bf16.gmra.mxu0 %v784
        %v1254 = vpop.f32.mrf.mxu0
        %v1255 = vadd.f32 %v1086, %v1254
        %v1256 = vpop.f32.mrf.mxu0
        %v1257 = vadd.f32 %v1088, %v1256
        %1258 = vmatmul.bf16.gmra.mxu0 %v786
        %v1259 = vpop.f32.mrf.mxu0
        %v1260 = vadd.f32 %v1091, %v1259
        %v1261 = vpop.f32.mrf.mxu0
        %v1262 = vadd.f32 %v1093, %v1261
        %1263 = vmatmul.bf16.gmra.mxu0 %v788
        %v1264 = vpop.f32.mrf.mxu0
        %v1265 = vadd.f32 %v1096, %v1264
        %v1266 = vpop.f32.mrf.mxu0
        %v1267 = vadd.f32 %v1098, %v1266
        %1268 = vmatmul.bf16.gmra.mxu0 %v790
        %v1269 = vpop.f32.mrf.mxu0
        %v1270 = vadd.f32 %v1101, %v1269
        %v1271 = vpop.f32.mrf.mxu0
        %v1272 = vadd.f32 %v1103, %v1271
        %1273 = vmatmul.bf16.gmra.mxu0 %v792
        %v1274 = vpop.f32.mrf.mxu0
        %v1275 = vadd.f32 %v1106, %v1274
        %v1276 = vpop.f32.mrf.mxu0
        %v1277 = vadd.f32 %v1108, %v1276
        %1278 = vmatmul.bf16.gmra.mxu0 %v794
        %v1279 = vpop.f32.mrf.mxu0
        %v1280 = vadd.f32 %v1111, %v1279
        %v1281 = vpop.f32.mrf.mxu0
        %v1282 = vadd.f32 %v1113, %v1281
        %1283 = vmatmul.bf16.gmra.mxu0 %v796
        %v1284 = vpop.f32.mrf.mxu0
        %v1285 = vadd.f32 %v1116, %v1284
        %v1286 = vpop.f32.mrf.mxu0
        %v1287 = vadd.f32 %v1118, %v1286
        %1288 = vmatmul.bf16.gmra.mxu0 %v798
        %v1289 = vpop.f32.mrf.mxu0
        %v1290 = vadd.f32 %v1121, %v1289
        %v1291 = vpop.f32.mrf.mxu0
        %v1292 = vadd.f32 %v1123, %v1291
        %1293 = vmatmul.bf16.gmra.mxu0 %v800
        %v1294 = vpop.f32.mrf.mxu0
        %v1295 = vadd.f32 %v1126, %v1294
        %v1296 = vpop.f32.mrf.mxu0
        %v1297 = vadd.f32 %v1128, %v1296
        %1298 = vdwg.mxu0
        %v1299 = vadd.f32 %v385, %v1140
        %v1300 = vadd.f32 %v386, %v1142
        %v1301 = vadd.f32 %v387, %v1145
        %v1302 = vadd.f32 %v388, %v1147
        %v1303 = vadd.f32 %v389, %v1150
        %v1304 = vadd.f32 %v390, %v1152
        %v1305 = vadd.f32 %v391, %v1155
        %v1306 = vadd.f32 %v392, %v1157
        %v1307 = vadd.f32 %v393, %v1160
        %v1308 = vadd.f32 %v394, %v1162
        %v1309 = vadd.f32 %v395, %v1165
        %v1310 = vadd.f32 %v396, %v1167
        %v1311 = vadd.f32 %v397, %v1170
        %v1312 = vadd.f32 %v398, %v1172
        %v1313 = vadd.f32 %v399, %v1175
        %v1314 = vadd.f32 %v400, %v1177
        %v1315 = vadd.f32 %v401, %v1180
        %v1316 = vadd.f32 %v402, %v1182
        %v1317 = vadd.f32 %v403, %v1185
        %v1318 = vadd.f32 %v404, %v1187
        %v1319 = vadd.f32 %v405, %v1190
        %v1320 = vadd.f32 %v406, %v1192
        %v1321 = vadd.f32 %v407, %v1195
        %v1322 = vadd.f32 %v408, %v1197
        %v1323 = vadd.f32 %v409, %v1200
        %v1324 = vadd.f32 %v410, %v1202
        %v1325 = vadd.f32 %v411, %v1205
        %v1326 = vadd.f32 %v412, %v1207
        %v1327 = vadd.f32 %v413, %v1210
        %v1328 = vadd.f32 %v414, %v1212
        %v1329 = vadd.f32 %v415, %v1215
        %v1330 = vadd.f32 %v416, %v1217
        %v1331 = vadd.f32 %v417, %v1220
        %v1332 = vadd.f32 %v418, %v1222
        %v1333 = vadd.f32 %v419, %v1225
        %v1334 = vadd.f32 %v420, %v1227
        %v1335 = vadd.f32 %v421, %v1230
        %v1336 = vadd.f32 %v422, %v1232
        %v1337 = vadd.f32 %v423, %v1235
        %v1338 = vadd.f32 %v424, %v1237
        %v1339 = vadd.f32 %v425, %v1240
        %v1340 = vadd.f32 %v426, %v1242
        %v1341 = vadd.f32 %v427, %v1245
        %v1342 = vadd.f32 %v428, %v1247
        %v1343 = vadd.f32 %v429, %v1250
        %v1344 = vadd.f32 %v430, %v1252
        %v1345 = vadd.f32 %v431, %v1255
        %v1346 = vadd.f32 %v432, %v1257
        %v1347 = vadd.f32 %v433, %v1260
        %v1348 = vadd.f32 %v434, %v1262
        %v1349 = vadd.f32 %v435, %v1265
        %v1350 = vadd.f32 %v436, %v1267
        %v1351 = vadd.f32 %v437, %v1270
        %v1352 = vadd.f32 %v438, %v1272
        %v1353 = vadd.f32 %v439, %v1275
        %v1354 = vadd.f32 %v440, %v1277
        %v1355 = vadd.f32 %v441, %v1280
        %v1356 = vadd.f32 %v442, %v1282
        %v1357 = vadd.f32 %v443, %v1285
        %v1358 = vadd.f32 %v444, %v1287
        %v1359 = vadd.f32 %v445, %v1290
        %v1360 = vadd.f32 %v446, %v1292
        %v1361 = vadd.f32 %v447, %v1295
        %v1362 = vadd.f32 %v448, %v1297
        %1363 = vst [vmem:[#allocation2] sm:$0xff] %v1299
        %1364 = vst [vmem:[#allocation2 + $0x8] sm:$0xff] %v1300
        %1365 = vst [vmem:[#allocation2 + $0x10] sm:$0xff] %v1301
        %1366 = vst [vmem:[#allocation2 + $0x18] sm:$0xff] %v1302
        %1367 = vst [vmem:[#allocation2 + $0x20] sm:$0xff] %v1303
        %1368 = vst [vmem:[#allocation2 + $0x28] sm:$0xff] %v1304
        %1369 = vst [vmem:[#allocation2 + $0x30] sm:$0xff] %v1305
        %1370 = vst [vmem:[#allocation2 + $0x38] sm:$0xff] %v1306
        %1371 = vst [vmem:[#allocation2 + $0x40] sm:$0xff] %v1307
        %1372 = vst [vmem:[#allocation2 + $0x48] sm:$0xff] %v1308
        %1373 = vst [vmem:[#allocation2 + $0x50] sm:$0xff] %v1309
        %1374 = vst [vmem:[#allocation2 + $0x58] sm:$0xff] %v1310
        %1375 = vst [vmem:[#allocation2 + $0x60] sm:$0xff] %v1311
        %1376 = vst [vmem:[#allocation2 + $0x68] sm:$0xff] %v1312
        %1377 = vst [vmem:[#allocation2 + $0x70] sm:$0xff] %v1313
        %1378 = vst [vmem:[#allocation2 + $0x78] sm:$0xff] %v1314
        %1379 = vst [vmem:[#allocation2 + $0x80] sm:$0xff] %v1315
        %1380 = vst [vmem:[#allocation2 + $0x88] sm:$0xff] %v1316
        %1381 = vst [vmem:[#allocation2 + $0x90] sm:$0xff] %v1317
        %1382 = vst [vmem:[#allocation2 + $0x98] sm:$0xff] %v1318
        %1383 = vst [vmem:[#allocation2 + $0xa0] sm:$0xff] %v1319
        %1384 = vst [vmem:[#allocation2 + $0xa8] sm:$0xff] %v1320
        %1385 = vst [vmem:[#allocation2 + $0xb0] sm:$0xff] %v1321
        %1386 = vst [vmem:[#allocation2 + $0xb8] sm:$0xff] %v1322
        %1387 = vst [vmem:[#allocation2 + $0xc0] sm:$0xff] %v1323
        %1388 = vst [vmem:[#allocation2 + $0xc8] sm:$0xff] %v1324
        %1389 = vst [vmem:[#allocation2 + $0xd0] sm:$0xff] %v1325
        %1390 = vst [vmem:[#allocation2 + $0xd8] sm:$0xff] %v1326
        %1391 = vst [vmem:[#allocation2 + $0xe0] sm:$0xff] %v1327
        %1392 = vst [vmem:[#allocation2 + $0xe8] sm:$0xff] %v1328
        %1393 = vst [vmem:[#allocation2 + $0xf0] sm:$0xff] %v1329
        %1394 = vst [vmem:[#allocation2 + $0xf8] sm:$0xff] %v1330
        %1395 = vst [vmem:[#allocation2 + $0x100] sm:$0xff] %v1331
        %1396 = vst [vmem:[#allocation2 + $0x108] sm:$0xff] %v1332
        %1397 = vst [vmem:[#allocation2 + $0x110] sm:$0xff] %v1333
        %1398 = vst [vmem:[#allocation2 + $0x118] sm:$0xff] %v1334
        %1399 = vst [vmem:[#allocation2 + $0x120] sm:$0xff] %v1335
        %1400 = vst [vmem:[#allocation2 + $0x128] sm:$0xff] %v1336
        %1401 = vst [vmem:[#allocation2 + $0x130] sm:$0xff] %v1337
        %1402 = vst [vmem:[#allocation2 + $0x138] sm:$0xff] %v1338
        %1403 = vst [vmem:[#allocation2 + $0x140] sm:$0xff] %v1339
        %1404 = vst [vmem:[#allocation2 + $0x148] sm:$0xff] %v1340
        %1405 = vst [vmem:[#allocation2 + $0x150] sm:$0xff] %v1341
        %1406 = vst [vmem:[#allocation2 + $0x158] sm:$0xff] %v1342
        %1407 = vst [vmem:[#allocation2 + $0x160] sm:$0xff] %v1343
        %1408 = vst [vmem:[#allocation2 + $0x168] sm:$0xff] %v1344
        %1409 = vst [vmem:[#allocation2 + $0x170] sm:$0xff] %v1345
        %1410 = vst [vmem:[#allocation2 + $0x178] sm:$0xff] %v1346
        %1411 = vst [vmem:[#allocation2 + $0x180] sm:$0xff] %v1347
        %1412 = vst [vmem:[#allocation2 + $0x188] sm:$0xff] %v1348
        %1413 = vst [vmem:[#allocation2 + $0x190] sm:$0xff] %v1349
        %1414 = vst [vmem:[#allocation2 + $0x198] sm:$0xff] %v1350
        %1415 = vst [vmem:[#allocation2 + $0x1a0] sm:$0xff] %v1351
        %1416 = vst [vmem:[#allocation2 + $0x1a8] sm:$0xff] %v1352
        %1417 = vst [vmem:[#allocation2 + $0x1b0] sm:$0xff] %v1353
        %1418 = vst [vmem:[#allocation2 + $0x1b8] sm:$0xff] %v1354
        %1419 = vst [vmem:[#allocation2 + $0x1c0] sm:$0xff] %v1355
        %1420 = vst [vmem:[#allocation2 + $0x1c8] sm:$0xff] %v1356
        %1421 = vst [vmem:[#allocation2 + $0x1d0] sm:$0xff] %v1357
        %1422 = vst [vmem:[#allocation2 + $0x1d8] sm:$0xff] %v1358
        %1423 = vst [vmem:[#allocation2 + $0x1e0] sm:$0xff] %v1359
        %1424 = vst [vmem:[#allocation2 + $0x1e8] sm:$0xff] %v1360
        %1425 = vst [vmem:[#allocation2 + $0x1f0] sm:$0xff] %v1361
        %1426 = vst [vmem:[#allocation2 + $0x1f8] sm:$0xff] %v1362
        // Predicated region
        $region57: #{tpu_custom_call.1} parent=35 // pred_check
          %p1427 = pneg %p317
        $region58: #{tpu_custom_call.1} parent=35 // pred_check_branch
          %1429 = sbr.rel (%p1427) target = $region60
        $region59: #{tpu_custom_call.1} parent=35 // pred_region
          %v1430 = vld [vmem:[#allocation2] sm:$0xff]
          %v1431 = vld [vmem:[#allocation2 + $0x8] sm:$0xff]
          %v1432 = vld [vmem:[#allocation2 + $0x10] sm:$0xff]
          %v1433 = vld [vmem:[#allocation2 + $0x18] sm:$0xff]
          %v1434 = vld [vmem:[#allocation2 + $0x20] sm:$0xff]
          %v1435 = vld [vmem:[#allocation2 + $0x28] sm:$0xff]
          %v1436 = vld [vmem:[#allocation2 + $0x30] sm:$0xff]
          %v1437 = vld [vmem:[#allocation2 + $0x38] sm:$0xff]
          %v1438 = vld [vmem:[#allocation2 + $0x40] sm:$0xff]
          %v1439 = vld [vmem:[#allocation2 + $0x48] sm:$0xff]
          %v1440 = vld [vmem:[#allocation2 + $0x50] sm:$0xff]
          %v1441 = vld [vmem:[#allocation2 + $0x58] sm:$0xff]
          %v1442 = vld [vmem:[#allocation2 + $0x60] sm:$0xff]
          %v1443 = vld [vmem:[#allocation2 + $0x68] sm:$0xff]
          %v1444 = vld [vmem:[#allocation2 + $0x70] sm:$0xff]
          %v1445 = vld [vmem:[#allocation2 + $0x78] sm:$0xff]
          %v1446 = vld [vmem:[#allocation2 + $0x80] sm:$0xff]
          %v1447 = vld [vmem:[#allocation2 + $0x88] sm:$0xff]
          %v1448 = vld [vmem:[#allocation2 + $0x90] sm:$0xff]
          %v1449 = vld [vmem:[#allocation2 + $0x98] sm:$0xff]
          %v1450 = vld [vmem:[#allocation2 + $0xa0] sm:$0xff]
          %v1451 = vld [vmem:[#allocation2 + $0xa8] sm:$0xff]
          %v1452 = vld [vmem:[#allocation2 + $0xb0] sm:$0xff]
          %v1453 = vld [vmem:[#allocation2 + $0xb8] sm:$0xff]
          %v1454 = vld [vmem:[#allocation2 + $0xc0] sm:$0xff]
          %v1455 = vld [vmem:[#allocation2 + $0xc8] sm:$0xff]
          %v1456 = vld [vmem:[#allocation2 + $0xd0] sm:$0xff]
          %v1457 = vld [vmem:[#allocation2 + $0xd8] sm:$0xff]
          %v1458 = vld [vmem:[#allocation2 + $0xe0] sm:$0xff]
          %v1459 = vld [vmem:[#allocation2 + $0xe8] sm:$0xff]
          %v1460 = vld [vmem:[#allocation2 + $0xf0] sm:$0xff]
          %v1461 = vld [vmem:[#allocation2 + $0xf8] sm:$0xff]
          %v1462 = vld [vmem:[#allocation2 + $0x100] sm:$0xff]
          %v1463 = vld [vmem:[#allocation2 + $0x108] sm:$0xff]
          %v1464 = vld [vmem:[#allocation2 + $0x110] sm:$0xff]
          %v1465 = vld [vmem:[#allocation2 + $0x118] sm:$0xff]
          %v1466 = vld [vmem:[#allocation2 + $0x120] sm:$0xff]
          %v1467 = vld [vmem:[#allocation2 + $0x128] sm:$0xff]
          %v1468 = vld [vmem:[#allocation2 + $0x130] sm:$0xff]
          %v1469 = vld [vmem:[#allocation2 + $0x138] sm:$0xff]
          %v1470 = vld [vmem:[#allocation2 + $0x140] sm:$0xff]
          %v1471 = vld [vmem:[#allocation2 + $0x148] sm:$0xff]
          %v1472 = vld [vmem:[#allocation2 + $0x150] sm:$0xff]
          %v1473 = vld [vmem:[#allocation2 + $0x158] sm:$0xff]
          %v1474 = vld [vmem:[#allocation2 + $0x160] sm:$0xff]
          %v1475 = vld [vmem:[#allocation2 + $0x168] sm:$0xff]
          %v1476 = vld [vmem:[#allocation2 + $0x170] sm:$0xff]
          %v1477 = vld [vmem:[#allocation2 + $0x178] sm:$0xff]
          %v1478 = vld [vmem:[#allocation2 + $0x180] sm:$0xff]
          %v1479 = vld [vmem:[#allocation2 + $0x188] sm:$0xff]
          %v1480 = vld [vmem:[#allocation2 + $0x190] sm:$0xff]
          %v1481 = vld [vmem:[#allocation2 + $0x198] sm:$0xff]
          %v1482 = vld [vmem:[#allocation2 + $0x1a0] sm:$0xff]
          %v1483 = vld [vmem:[#allocation2 + $0x1a8] sm:$0xff]
          %v1484 = vld [vmem:[#allocation2 + $0x1b0] sm:$0xff]
          %v1485 = vld [vmem:[#allocation2 + $0x1b8] sm:$0xff]
          %v1486 = vld [vmem:[#allocation2 + $0x1c0] sm:$0xff]
          %v1487 = vld [vmem:[#allocation2 + $0x1c8] sm:$0xff]
          %v1488 = vld [vmem:[#allocation2 + $0x1d0] sm:$0xff]
          %v1489 = vld [vmem:[#allocation2 + $0x1d8] sm:$0xff]
          %v1490 = vld [vmem:[#allocation2 + $0x1e0] sm:$0xff]
          %v1491 = vld [vmem:[#allocation2 + $0x1e8] sm:$0xff]
          %v1492 = vld [vmem:[#allocation2 + $0x1f0] sm:$0xff]
          %v1493 = vld [vmem:[#allocation2 + $0x1f8] sm:$0xff]
          %v1494 = vld [vmem:[#allocation8] sm:$0x1]
          %v1496 = vperm.slane %v1494, 0
          %v1498 = vadd.f32 %v1430, %v1496
          %v1499 = vadd.f32 %v1431, %v1496
          %v1500 = vadd.f32 %v1432, %v1496
          %v1501 = vadd.f32 %v1433, %v1496
          %v1502 = vadd.f32 %v1434, %v1496
          %v1503 = vadd.f32 %v1435, %v1496
          %v1504 = vadd.f32 %v1436, %v1496
          %v1505 = vadd.f32 %v1437, %v1496
          %v1506 = vadd.f32 %v1438, %v1496
          %v1507 = vadd.f32 %v1439, %v1496
          %v1508 = vadd.f32 %v1440, %v1496
          %v1509 = vadd.f32 %v1441, %v1496
          %v1510 = vadd.f32 %v1442, %v1496
          %v1511 = vadd.f32 %v1443, %v1496
          %v1512 = vadd.f32 %v1444, %v1496
          %v1513 = vadd.f32 %v1445, %v1496
          %v1514 = vadd.f32 %v1446, %v1496
          %v1515 = vadd.f32 %v1447, %v1496
          %v1516 = vadd.f32 %v1448, %v1496
          %v1517 = vadd.f32 %v1449, %v1496
          %v1518 = vadd.f32 %v1450, %v1496
          %v1519 = vadd.f32 %v1451, %v1496
          %v1520 = vadd.f32 %v1452, %v1496
          %v1521 = vadd.f32 %v1453, %v1496
          %v1522 = vadd.f32 %v1454, %v1496
          %v1523 = vadd.f32 %v1455, %v1496
          %v1524 = vadd.f32 %v1456, %v1496
          %v1525 = vadd.f32 %v1457, %v1496
          %v1526 = vadd.f32 %v1458, %v1496
          %v1527 = vadd.f32 %v1459, %v1496
          %v1528 = vadd.f32 %v1460, %v1496
          %v1529 = vadd.f32 %v1461, %v1496
          %v1530 = vadd.f32 %v1462, %v1496
          %v1531 = vadd.f32 %v1463, %v1496
          %v1532 = vadd.f32 %v1464, %v1496
          %v1533 = vadd.f32 %v1465, %v1496
          %v1534 = vadd.f32 %v1466, %v1496
          %v1535 = vadd.f32 %v1467, %v1496
          %v1536 = vadd.f32 %v1468, %v1496
          %v1537 = vadd.f32 %v1469, %v1496
          %v1538 = vadd.f32 %v1470, %v1496
          %v1539 = vadd.f32 %v1471, %v1496
          %v1540 = vadd.f32 %v1472, %v1496
          %v1541 = vadd.f32 %v1473, %v1496
          %v1542 = vadd.f32 %v1474, %v1496
          %v1543 = vadd.f32 %v1475, %v1496
          %v1544 = vadd.f32 %v1476, %v1496
          %v1545 = vadd.f32 %v1477, %v1496
          %v1546 = vadd.f32 %v1478, %v1496
          %v1547 = vadd.f32 %v1479, %v1496
          %v1548 = vadd.f32 %v1480, %v1496
          %v1549 = vadd.f32 %v1481, %v1496
          %v1550 = vadd.f32 %v1482, %v1496
          %v1551 = vadd.f32 %v1483, %v1496
          %v1552 = vadd.f32 %v1484, %v1496
          %v1553 = vadd.f32 %v1485, %v1496
          %v1554 = vadd.f32 %v1486, %v1496
          %v1555 = vadd.f32 %v1487, %v1496
          %v1556 = vadd.f32 %v1488, %v1496
          %v1557 = vadd.f32 %v1489, %v1496
          %v1558 = vadd.f32 %v1490, %v1496
          %v1559 = vadd.f32 %v1491, %v1496
          %v1560 = vadd.f32 %v1492, %v1496
          %v1561 = vadd.f32 %v1493, %v1496
          %v1562 = vld [vmem:[#allocation9] sm:$0x1]
          %vm1563 = vcmp.ge.f32.partialorder %v1498, 0.0
          %vm1564 = vcmp.ge.f32.partialorder %v1499, 0.0
          %vm1565 = vcmp.ge.f32.partialorder %v1500, 0.0
          %vm1566 = vcmp.ge.f32.partialorder %v1501, 0.0
          %vm1567 = vcmp.ge.f32.partialorder %v1502, 0.0
          %vm1568 = vcmp.ge.f32.partialorder %v1503, 0.0
          %vm1569 = vcmp.ge.f32.partialorder %v1504, 0.0
          %vm1570 = vcmp.ge.f32.partialorder %v1505, 0.0
          %vm1571 = vcmp.ge.f32.partialorder %v1506, 0.0
          %vm1572 = vcmp.ge.f32.partialorder %v1507, 0.0
          %vm1573 = vcmp.ge.f32.partialorder %v1508, 0.0
          %vm1574 = vcmp.ge.f32.partialorder %v1509, 0.0
          %vm1575 = vcmp.ge.f32.partialorder %v1510, 0.0
          %vm1576 = vcmp.ge.f32.partialorder %v1511, 0.0
          %vm1577 = vcmp.ge.f32.partialorder %v1512, 0.0
          %vm1578 = vcmp.ge.f32.partialorder %v1513, 0.0
          %vm1579 = vcmp.ge.f32.partialorder %v1514, 0.0
          %vm1580 = vcmp.ge.f32.partialorder %v1515, 0.0
          %vm1581 = vcmp.ge.f32.partialorder %v1516, 0.0
          %vm1582 = vcmp.ge.f32.partialorder %v1517, 0.0
          %vm1583 = vcmp.ge.f32.partialorder %v1518, 0.0
          %vm1584 = vcmp.ge.f32.partialorder %v1519, 0.0
          %vm1585 = vcmp.ge.f32.partialorder %v1520, 0.0
          %vm1586 = vcmp.ge.f32.partialorder %v1521, 0.0
          %vm1587 = vcmp.ge.f32.partialorder %v1522, 0.0
          %vm1588 = vcmp.ge.f32.partialorder %v1523, 0.0
          %vm1589 = vcmp.ge.f32.partialorder %v1524, 0.0
          %vm1590 = vcmp.ge.f32.partialorder %v1525, 0.0
          %vm1591 = vcmp.ge.f32.partialorder %v1526, 0.0
          %vm1592 = vcmp.ge.f32.partialorder %v1527, 0.0
          %vm1593 = vcmp.ge.f32.partialorder %v1528, 0.0
          %vm1594 = vcmp.ge.f32.partialorder %v1529, 0.0
          %vm1595 = vcmp.ge.f32.partialorder %v1530, 0.0
          %vm1596 = vcmp.ge.f32.partialorder %v1531, 0.0
          %vm1597 = vcmp.ge.f32.partialorder %v1532, 0.0
          %vm1598 = vcmp.ge.f32.partialorder %v1533, 0.0
          %vm1599 = vcmp.ge.f32.partialorder %v1534, 0.0
          %vm1600 = vcmp.ge.f32.partialorder %v1535, 0.0
          %vm1601 = vcmp.ge.f32.partialorder %v1536, 0.0
          %vm1602 = vcmp.ge.f32.partialorder %v1537, 0.0
          %vm1603 = vcmp.ge.f32.partialorder %v1538, 0.0
          %vm1604 = vcmp.ge.f32.partialorder %v1539, 0.0
          %vm1605 = vcmp.ge.f32.partialorder %v1540, 0.0
          %vm1606 = vcmp.ge.f32.partialorder %v1541, 0.0
          %vm1607 = vcmp.ge.f32.partialorder %v1542, 0.0
          %vm1608 = vcmp.ge.f32.partialorder %v1543, 0.0
          %vm1609 = vcmp.ge.f32.partialorder %v1544, 0.0
          %vm1610 = vcmp.ge.f32.partialorder %v1545, 0.0
          %vm1611 = vcmp.ge.f32.partialorder %v1546, 0.0
          %vm1612 = vcmp.ge.f32.partialorder %v1547, 0.0
          %vm1613 = vcmp.ge.f32.partialorder %v1548, 0.0
          %vm1614 = vcmp.ge.f32.partialorder %v1549, 0.0
          %vm1615 = vcmp.ge.f32.partialorder %v1550, 0.0
          %vm1616 = vcmp.ge.f32.partialorder %v1551, 0.0
          %vm1617 = vcmp.ge.f32.partialorder %v1552, 0.0
          %vm1618 = vcmp.ge.f32.partialorder %v1553, 0.0
          %vm1619 = vcmp.ge.f32.partialorder %v1554, 0.0
          %vm1620 = vcmp.ge.f32.partialorder %v1555, 0.0
          %vm1621 = vcmp.ge.f32.partialorder %v1556, 0.0
          %vm1622 = vcmp.ge.f32.partialorder %v1557, 0.0
          %vm1623 = vcmp.ge.f32.partialorder %v1558, 0.0
          %vm1624 = vcmp.ge.f32.partialorder %v1559, 0.0
          %vm1625 = vcmp.ge.f32.partialorder %v1560, 0.0
          %vm1626 = vcmp.ge.f32.partialorder %v1561, 0.0
          %v1628 = vperm.slane %v1562, 0
          %v1630 = vmul.f32 %v1628, %v1498
          %v1631 = vmul.f32 %v1628, %v1499
          %v1632 = vmul.f32 %v1628, %v1500
          %v1633 = vmul.f32 %v1628, %v1501
          %v1634 = vmul.f32 %v1628, %v1502
          %v1635 = vmul.f32 %v1628, %v1503
          %v1636 = vmul.f32 %v1628, %v1504
          %v1637 = vmul.f32 %v1628, %v1505
          %v1638 = vmul.f32 %v1628, %v1506
          %v1639 = vmul.f32 %v1628, %v1507
          %v1640 = vmul.f32 %v1628, %v1508
          %v1641 = vmul.f32 %v1628, %v1509
          %v1642 = vmul.f32 %v1628, %v1510
          %v1643 = vmul.f32 %v1628, %v1511
          %v1644 = vmul.f32 %v1628, %v1512
          %v1645 = vmul.f32 %v1628, %v1513
          %v1646 = vmul.f32 %v1628, %v1514
          %v1647 = vmul.f32 %v1628, %v1515
          %v1648 = vmul.f32 %v1628, %v1516
          %v1649 = vmul.f32 %v1628, %v1517
          %v1650 = vmul.f32 %v1628, %v1518
          %v1651 = vmul.f32 %v1628, %v1519
          %v1652 = vmul.f32 %v1628, %v1520
          %v1653 = vmul.f32 %v1628, %v1521
          %v1654 = vmul.f32 %v1628, %v1522
          %v1655 = vmul.f32 %v1628, %v1523
          %v1656 = vmul.f32 %v1628, %v1524
          %v1657 = vmul.f32 %v1628, %v1525
          %v1658 = vmul.f32 %v1628, %v1526
          %v1659 = vmul.f32 %v1628, %v1527
          %v1660 = vmul.f32 %v1628, %v1528
          %v1661 = vmul.f32 %v1628, %v1529
          %v1662 = vmul.f32 %v1628, %v1530
          %v1663 = vmul.f32 %v1628, %v1531
          %v1664 = vmul.f32 %v1628, %v1532
          %v1665 = vmul.f32 %v1628, %v1533
          %v1666 = vmul.f32 %v1628, %v1534
          %v1667 = vmul.f32 %v1628, %v1535
          %v1668 = vmul.f32 %v1628, %v1536
          %v1669 = vmul.f32 %v1628, %v1537
          %v1670 = vmul.f32 %v1628, %v1538
          %v1671 = vmul.f32 %v1628, %v1539
          %v1672 = vmul.f32 %v1628, %v1540
          %v1673 = vmul.f32 %v1628, %v1541
          %v1674 = vmul.f32 %v1628, %v1542
          %v1675 = vmul.f32 %v1628, %v1543
          %v1676 = vmul.f32 %v1628, %v1544
          %v1677 = vmul.f32 %v1628, %v1545
          %v1678 = vmul.f32 %v1628, %v1546
          %v1679 = vmul.f32 %v1628, %v1547
          %v1680 = vmul.f32 %v1628, %v1548
          %v1681 = vmul.f32 %v1628, %v1549
          %v1682 = vmul.f32 %v1628, %v1550
          %v1683 = vmul.f32 %v1628, %v1551
          %v1684 = vmul.f32 %v1628, %v1552
          %v1685 = vmul.f32 %v1628, %v1553
          %v1686 = vmul.f32 %v1628, %v1554
          %v1687 = vmul.f32 %v1628, %v1555
          %v1688 = vmul.f32 %v1628, %v1556
          %v1689 = vmul.f32 %v1628, %v1557
          %v1690 = vmul.f32 %v1628, %v1558
          %v1691 = vmul.f32 %v1628, %v1559
          %v1692 = vmul.f32 %v1628, %v1560
          %v1693 = vmul.f32 %v1628, %v1561
          %v1694 = vsel %vm1563, %v1498, %v1630
          %v1695 = vsel %vm1564, %v1499, %v1631
          %v1696 = vsel %vm1565, %v1500, %v1632
          %v1697 = vsel %vm1566, %v1501, %v1633
          %v1698 = vsel %vm1567, %v1502, %v1634
          %v1699 = vsel %vm1568, %v1503, %v1635
          %v1700 = vsel %vm1569, %v1504, %v1636
          %v1701 = vsel %vm1570, %v1505, %v1637
          %v1702 = vsel %vm1571, %v1506, %v1638
          %v1703 = vsel %vm1572, %v1507, %v1639
          %v1704 = vsel %vm1573, %v1508, %v1640
          %v1705 = vsel %vm1574, %v1509, %v1641
          %v1706 = vsel %vm1575, %v1510, %v1642
          %v1707 = vsel %vm1576, %v1511, %v1643
          %v1708 = vsel %vm1577, %v1512, %v1644
          %v1709 = vsel %vm1578, %v1513, %v1645
          %v1710 = vsel %vm1579, %v1514, %v1646
          %v1711 = vsel %vm1580, %v1515, %v1647
          %v1712 = vsel %vm1581, %v1516, %v1648
          %v1713 = vsel %vm1582, %v1517, %v1649
          %v1714 = vsel %vm1583, %v1518, %v1650
          %v1715 = vsel %vm1584, %v1519, %v1651
          %v1716 = vsel %vm1585, %v1520, %v1652
          %v1717 = vsel %vm1586, %v1521, %v1653
          %v1718 = vsel %vm1587, %v1522, %v1654
          %v1719 = vsel %vm1588, %v1523, %v1655
          %v1720 = vsel %vm1589, %v1524, %v1656
          %v1721 = vsel %vm1590, %v1525, %v1657
          %v1722 = vsel %vm1591, %v1526, %v1658
          %v1723 = vsel %vm1592, %v1527, %v1659
          %v1724 = vsel %vm1593, %v1528, %v1660
          %v1725 = vsel %vm1594, %v1529, %v1661
          %v1726 = vsel %vm1595, %v1530, %v1662
          %v1727 = vsel %vm1596, %v1531, %v1663
          %v1728 = vsel %vm1597, %v1532, %v1664
          %v1729 = vsel %vm1598, %v1533, %v1665
          %v1730 = vsel %vm1599, %v1534, %v1666
          %v1731 = vsel %vm1600, %v1535, %v1667
          %v1732 = vsel %vm1601, %v1536, %v1668
          %v1733 = vsel %vm1602, %v1537, %v1669
          %v1734 = vsel %vm1603, %v1538, %v1670
          %v1735 = vsel %vm1604, %v1539, %v1671
          %v1736 = vsel %vm1605, %v1540, %v1672
          %v1737 = vsel %vm1606, %v1541, %v1673
          %v1738 = vsel %vm1607, %v1542, %v1674
          %v1739 = vsel %vm1608, %v1543, %v1675
          %v1740 = vsel %vm1609, %v1544, %v1676
          %v1741 = vsel %vm1610, %v1545, %v1677
          %v1742 = vsel %vm1611, %v1546, %v1678
          %v1743 = vsel %vm1612, %v1547, %v1679
          %v1744 = vsel %vm1613, %v1548, %v1680
          %v1745 = vsel %vm1614, %v1549, %v1681
          %v1746 = vsel %vm1615, %v1550, %v1682
          %v1747 = vsel %vm1616, %v1551, %v1683
          %v1748 = vsel %vm1617, %v1552, %v1684
          %v1749 = vsel %vm1618, %v1553, %v1685
          %v1750 = vsel %vm1619, %v1554, %v1686
          %v1751 = vsel %vm1620, %v1555, %v1687
          %v1752 = vsel %vm1621, %v1556, %v1688
          %v1753 = vsel %vm1622, %v1557, %v1689
          %v1754 = vsel %vm1623, %v1558, %v1690
          %v1755 = vsel %vm1624, %v1559, %v1691
          %v1756 = vsel %vm1625, %v1560, %v1692
          %v1757 = vsel %vm1626, %v1561, %v1693
          %1758 = vst [vmem:[%s312] sm:$0xff] %v1694
          %1759 = vst [vmem:[%s312 + $0x8] sm:$0xff] %v1695
          %1760 = vst [vmem:[%s312 + $0x10] sm:$0xff] %v1696
          %1761 = vst [vmem:[%s312 + $0x18] sm:$0xff] %v1697
          %1762 = vst [vmem:[%s312 + $0x20] sm:$0xff] %v1698
          %1763 = vst [vmem:[%s312 + $0x28] sm:$0xff] %v1699
          %1764 = vst [vmem:[%s312 + $0x30] sm:$0xff] %v1700
          %1765 = vst [vmem:[%s312 + $0x38] sm:$0xff] %v1701
          %1766 = vst [vmem:[%s312 + $0x40] sm:$0xff] %v1702
          %1767 = vst [vmem:[%s312 + $0x48] sm:$0xff] %v1703
          %1768 = vst [vmem:[%s312 + $0x50] sm:$0xff] %v1704
          %1769 = vst [vmem:[%s312 + $0x58] sm:$0xff] %v1705
          %1770 = vst [vmem:[%s312 + $0x60] sm:$0xff] %v1706
          %1771 = vst [vmem:[%s312 + $0x68] sm:$0xff] %v1707
          %1772 = vst [vmem:[%s312 + $0x70] sm:$0xff] %v1708
          %1773 = vst [vmem:[%s312 + $0x78] sm:$0xff] %v1709
          %1774 = vst [vmem:[%s312 + $0x80] sm:$0xff] %v1710
          %1775 = vst [vmem:[%s312 + $0x88] sm:$0xff] %v1711
          %1776 = vst [vmem:[%s312 + $0x90] sm:$0xff] %v1712
          %1777 = vst [vmem:[%s312 + $0x98] sm:$0xff] %v1713
          %1778 = vst [vmem:[%s312 + $0xa0] sm:$0xff] %v1714
          %1779 = vst [vmem:[%s312 + $0xa8] sm:$0xff] %v1715
          %1780 = vst [vmem:[%s312 + $0xb0] sm:$0xff] %v1716
          %1781 = vst [vmem:[%s312 + $0xb8] sm:$0xff] %v1717
          %1782 = vst [vmem:[%s312 + $0xc0] sm:$0xff] %v1718
          %1783 = vst [vmem:[%s312 + $0xc8] sm:$0xff] %v1719
          %1784 = vst [vmem:[%s312 + $0xd0] sm:$0xff] %v1720
          %1785 = vst [vmem:[%s312 + $0xd8] sm:$0xff] %v1721
          %1786 = vst [vmem:[%s312 + $0xe0] sm:$0xff] %v1722
          %1787 = vst [vmem:[%s312 + $0xe8] sm:$0xff] %v1723
          %1788 = vst [vmem:[%s312 + $0xf0] sm:$0xff] %v1724
          %1789 = vst [vmem:[%s312 + $0xf8] sm:$0xff] %v1725
          %1790 = vst [vmem:[%s312 + $0x100] sm:$0xff] %v1726
          %1791 = vst [vmem:[%s312 + $0x108] sm:$0xff] %v1727
          %1792 = vst [vmem:[%s312 + $0x110] sm:$0xff] %v1728
          %1793 = vst [vmem:[%s312 + $0x118] sm:$0xff] %v1729
          %1794 = vst [vmem:[%s312 + $0x120] sm:$0xff] %v1730
          %1795 = vst [vmem:[%s312 + $0x128] sm:$0xff] %v1731
          %1796 = vst [vmem:[%s312 + $0x130] sm:$0xff] %v1732
          %1797 = vst [vmem:[%s312 + $0x138] sm:$0xff] %v1733
          %1798 = vst [vmem:[%s312 + $0x140] sm:$0xff] %v1734
          %1799 = vst [vmem:[%s312 + $0x148] sm:$0xff] %v1735
          %1800 = vst [vmem:[%s312 + $0x150] sm:$0xff] %v1736
          %1801 = vst [vmem:[%s312 + $0x158] sm:$0xff] %v1737
          %1802 = vst [vmem:[%s312 + $0x160] sm:$0xff] %v1738
          %1803 = vst [vmem:[%s312 + $0x168] sm:$0xff] %v1739
          %1804 = vst [vmem:[%s312 + $0x170] sm:$0xff] %v1740
          %1805 = vst [vmem:[%s312 + $0x178] sm:$0xff] %v1741
          %1806 = vst [vmem:[%s312 + $0x180] sm:$0xff] %v1742
          %1807 = vst [vmem:[%s312 + $0x188] sm:$0xff] %v1743
          %1808 = vst [vmem:[%s312 + $0x190] sm:$0xff] %v1744
          %1809 = vst [vmem:[%s312 + $0x198] sm:$0xff] %v1745
          %1810 = vst [vmem:[%s312 + $0x1a0] sm:$0xff] %v1746
          %1811 = vst [vmem:[%s312 + $0x1a8] sm:$0xff] %v1747
          %1812 = vst [vmem:[%s312 + $0x1b0] sm:$0xff] %v1748
          %1813 = vst [vmem:[%s312 + $0x1b8] sm:$0xff] %v1749
          %1814 = vst [vmem:[%s312 + $0x1c0] sm:$0xff] %v1750
          %1815 = vst [vmem:[%s312 + $0x1c8] sm:$0xff] %v1751
          %1816 = vst [vmem:[%s312 + $0x1d0] sm:$0xff] %v1752
          %1817 = vst [vmem:[%s312 + $0x1d8] sm:$0xff] %v1753
          %1818 = vst [vmem:[%s312 + $0x1e0] sm:$0xff] %v1754
          %1819 = vst [vmem:[%s312 + $0x1e8] sm:$0xff] %v1755
          %1820 = vst [vmem:[%s312 + $0x1f0] sm:$0xff] %v1756
          %1821 = vst [vmem:[%s312 + $0x1f8] sm:$0xff] %v1757
        $region60: #{tpu_custom_call.1} parent=35 // pred_fallthru
          _
        %s1822 = sand.u32 %s160, 1
        %s1823 = scalar_lea.sflag [#allocation5], %s1822
        %s1824 = sand.u32 %s160, 1
        %s1825 = smul.addr %s1824, 512
        %s1826 = scalar_lea.vmem [#allocation11], %s1825
        // Predicated region
        $region61: #{tpu_custom_call.1} parent=35 // pred_check
          %p1827 = pneg %p170
        $region62: #{tpu_custom_call.1} parent=35 // pred_check_branch
          %1829 = sbr.rel (%p1827) target = $region64
        $region63: #{tpu_custom_call.1} parent=35 // pred_region
          %s1830 = smul.u32 64, %s28
          %1832 = vsyncadd %s1823, 0
          %s1833 = sadd.s32 %s29, %s1830
          %s1834 = smul.addr %s1833, 8
          %s1835 = scalar_lea.hbm %s4, %s1834
          %s1836 = sshll.u32 %s1826, 4
          %s1837 = int_to_ptr.vmem [resolvable:$true] %s1836
          %s1838 = sshll.u32 %s1835, 4
          %s1839 = int_to_ptr.hbm [resolvable:$true] %s1838
          %1844 = dma.vmem_to_hbm [thread:$0]  %s1837, 8192, %s1839, %s1823, 128, 128, 8
        $region64: #{tpu_custom_call.1} parent=35 // pred_fallthru
          _
      $region36: #{tpu_custom_call.1} parent=5 // pred_fallthru
        _
      %p1845 = scmp.le.s32.totalorder 2, %s18
      // Predicated region
      $region65: #{tpu_custom_call.1} parent=5 // pred_check
        %p1846 = pneg %p1845
      $region66: #{tpu_custom_call.1} parent=5 // pred_check_branch
        %1848 = sbr.rel (%p1846) target = $region68
      $region67: #{tpu_custom_call.1} parent=5 // pred_region
        %s1849 = ssub.s32 %s18, 2
        // Predicated region
        $region69: #{tpu_custom_call.1} parent=67 // pred_check
          %p1850 = pneg %p176
        $region70: #{tpu_custom_call.1} parent=67 // pred_check_branch
          %1852 = sbr.rel (%p1850) target = $region72
        $region71: #{tpu_custom_call.1} parent=67 // pred_region
          %s1853 = sand.u32 %s161, 1
          %s1854 = scalar_lea.sflag [#allocation5], %s1853
          %s1855 = sand.u32 %s161, 1
          %s1856 = smul.addr %s1855, 512
          %s1857 = scalar_lea.vmem [#allocation11], %s1856
          %1859 = dma.done %s1854, 8192
        $region72: #{tpu_custom_call.1} parent=67 // pred_fallthru
          _
      $region68: #{tpu_custom_call.1} parent=5 // pred_fallthru
        _
    $region6: #{tpu_custom_call.1} parent=1 // loop_footer
      %s22 = sadd.s32 1, %s18
    $region7: #{tpu_custom_call.1} parent=1 // loop_footer_branch
      %17 = sbr.rel target = $region3
    $region8: #{tpu_custom_call.1} parent=1 // loop_exit
      _
    %1860 = vsyncpa [#allocation4], 1
    %s1861 = scalar_lea.sflag [#allocation4], 1
    %1862 = vsyncpa %s1861, 1
    %1863 = vsyncpa [#allocation7], 1
    %1864 = vsyncpa [#allocation10], 1
    %1865 = vsyncpa [#allocation5], 1
    %s1866 = scalar_lea.sflag [#allocation5], 1
    %1867 = vsyncpa %s1866, 1

</llo_original>
